<compile_context>
chip_gen: v5e
topology: v5e:2x2
jax: 0.10.0
libtpu: 0.0.40
codegen_flags: <defaults>
</compile_context>

<pallas_src>
import jax
import jax.numpy as jnp
from jax import lax
from jax.experimental import pallas as pl
from jax.experimental.pallas import tpu as pltpu

# ---- small-but-consistent config (CLIP text transformer analog) ----
B = 2          # batch of prompts
S = 8          # context length (n_ctx)
D = 32         # transformer width
H = 4          # attention heads
HD = D // H    # head dim
L = 2          # transformer layers
E = 16         # text_projection output dim
LN_EPS = 1e-5
NEG_INF = -1e9  # stands in for float('-inf') in CLIP's causal attention mask


# ------------------------------ in-kernel helpers ------------------------------
def _layernorm(x, g, b, eps=LN_EPS):
    mu = jnp.mean(x, axis=-1, keepdims=True)
    var = jnp.mean(jnp.square(x - mu), axis=-1, keepdims=True)
    return (x - mu) * lax.rsqrt(var + eps) * g + b


def _softmax_last(x):
    m = jnp.max(x, axis=-1, keepdims=True)
    e = jnp.exp(x - m)
    return e / jnp.sum(e, axis=-1, keepdims=True)


# ------------------------------ fused kernel ------------------------------
def text_encoder_kernel(eot_ref,                        # (B,) int32, SMEM (scalar prefetch)
                        x_ref,                          # (1, S, D)  prompt block for this b
                        pos_ref, mask_ref,              # (S, D), (S, S)
                        ln1g_ref, ln1b_ref,             # (L, 1, D)
                        wqkv_ref, bqkv_ref,             # (L, 3, D, D), (L, 3, 1, D)
                        wo_ref, bo_ref,                 # (L, D, D), (L, 1, D)
                        ln2g_ref, ln2b_ref,             # (L, 1, D)
                        wfc_ref, bfc_ref,               # (L, D, 4D), (L, 1, 4D)
                        wp_ref, bp_ref,                 # (L, 4D, D), (L, 1, D)
                        lnfg_ref, lnfb_ref, proj_ref,   # (1, D), (1, D), (D, E)
                        o_ref,                          # (1, 1, E)
                        xf_scr):                        # VMEM (S, D) scratch (EOT gather)
    b = pl.program_id(0)
    scale = 1.0 / (HD ** 0.5)
    mask = mask_ref[...]                                # (S, S) causal mask (0 / NEG_INF)

    # x = prompts + positional_embedding  (this prompt only; x stays in registers)
    x = x_ref[0] + pos_ref[...]                         # (S, D)

    for l in range(L):                                  # static unroll over layers
        # ---- multi-head self-attention:  x = x + MHA(LN1(x), mask) ----
        h = _layernorm(x, ln1g_ref[l], ln1b_ref[l])
        q = jnp.dot(h, wqkv_ref[l, 0], preferred_element_type=jnp.float32) + bqkv_ref[l, 0]
        k = jnp.dot(h, wqkv_ref[l, 1], preferred_element_type=jnp.float32) + bqkv_ref[l, 1]
        v = jnp.dot(h, wqkv_ref[l, 2], preferred_element_type=jnp.float32) + bqkv_ref[l, 2]

        # All-head score tiles stacked on the sublane axis -> ONE softmax for all heads.
        scores = []
        for hh in range(H):
            sl = slice(hh * HD, (hh + 1) * HD)
            s_h = lax.dot_general(q[:, sl], k[:, sl],
                                  (((1,), (1,)), ((), ())),
                                  preferred_element_type=jnp.float32)   # (S, S)
            scores.append(s_h * scale + mask)
        p_all = _softmax_last(jnp.concatenate(scores, axis=0))          # (H*S, S)

        heads = []
        for hh in range(H):
            p_h = p_all[hh * S:(hh + 1) * S, :]                         # (S, S)
            heads.append(jnp.dot(p_h, v[:, hh * HD:(hh + 1) * HD],
                                 preferred_element_type=jnp.float32))   # (S, HD)
        attn = jnp.concatenate(heads, axis=-1)                          # (S, D), in registers

        x = x + jnp.dot(attn, wo_ref[l], preferred_element_type=jnp.float32) + bo_ref[l]

        # ---- MLP with QuickGELU:  x = x + MLP(LN2(x)) ----
        h2 = _layernorm(x, ln2g_ref[l], ln2b_ref[l])
        m = jnp.dot(h2, wfc_ref[l], preferred_element_type=jnp.float32) + bfc_ref[l]
        m = m * jax.nn.sigmoid(1.702 * m)
        x = x + jnp.dot(m, wp_ref[l], preferred_element_type=jnp.float32) + bp_ref[l]

    # ---- ln_final + EOT-token selection + text_projection ----
    xf_scr[...] = x
    idx = eot_ref[b]
    row = xf_scr[pl.ds(idx, 1), :]                      # (1, D) dynamic row gather
    hf = _layernorm(row, lnfg_ref[...], lnfb_ref[...])
    o_ref[0] = jnp.dot(hf, proj_ref[...], preferred_element_type=jnp.float32)


# ------------------------------ wrapper ------------------------------
def _full_spec(shape):
    zeros = (0,) * len(shape)
    return pl.BlockSpec(shape, lambda b, eot, _z=zeros: _z)


@jax.jit
def text_encoder(prompts, tokenized_prompts, params):
    # glue: integer argmax over token ids picks the EOT position per prompt
    eot_idx = jnp.argmax(tokenized_prompts, axis=-1).astype(jnp.int32)

    stk = params["stk"]
    tensor_args = (prompts, params["pos"], params["mask"],
                   stk["ln1_g"], stk["ln1_b"], stk["w_qkv"], stk["b_qkv"],
                   stk["w_o"], stk["b_o"], stk["ln2_g"], stk["ln2_b"],
                   stk["w_fc"], stk["b_fc"], stk["w_proj"], stk["b_proj"],
                   params["lnf_g"], params["lnf_b"], params["proj"])

    in_specs = [pl.BlockSpec((1, S, D), lambda b, eot: (b, 0, 0))]     # prompts: per-batch block
    in_specs += [_full_spec(a.shape) for a in tensor_args[1:]]          # everything else resident

    out = pl.pallas_call(
        text_encoder_kernel,
        out_shape=jax.ShapeDtypeStruct((B, 1, E), jnp.float32),
        grid_spec=pltpu.PrefetchScalarGridSpec(
            num_scalar_prefetch=1,
            grid=(B,),
            in_specs=in_specs,
            out_specs=pl.BlockSpec((1, 1, E), lambda b, eot: (b, 0, 0)),
            scratch_shapes=[pltpu.VMEM((S, D), jnp.float32)],
        ),
        compiler_params=pltpu.CompilerParams(dimension_semantics=("parallel",)),
    )(eot_idx, *tensor_args)
    return out.reshape(B, E)


# ------------------------------ pure-JAX reference ------------------------------
def _ref_ln(x, g, b):
    mu = jnp.mean(x, axis=-1, keepdims=True)
    var = jnp.mean(jnp.square(x - mu), axis=-1, keepdims=True)
    return (x - mu) * lax.rsqrt(var + LN_EPS) * g + b


def text_encoder_ref(prompts, tokenized_prompts, params):
    s = params["stk"]
    x = prompts + params["pos"][None]
    for l in range(L):
        h = _ref_ln(x, s["ln1_g"][l, 0], s["ln1_b"][l, 0])
        q = h @ s["w_qkv"][l, 0] + s["b_qkv"][l, 0, 0]
        k = h @ s["w_qkv"][l, 1] + s["b_qkv"][l, 1, 0]
        v = h @ s["w_qkv"][l, 2] + s["b_qkv"][l, 2, 0]
        qh = q.reshape(B, S, H, HD).transpose(0, 2, 1, 3)
        kh = k.reshape(B, S, H, HD).transpose(0, 2, 1, 3)
        vh = v.reshape(B, S, H, HD).transpose(0, 2, 1, 3)
        sc = jnp.einsum("bhqd,bhkd->bhqk", qh, kh) * (1.0 / (HD ** 0.5)) + params["mask"]
        p = jax.nn.softmax(sc, axis=-1)
        o = jnp.einsum("bhqk,bhkd->bhqd", p, vh).transpose(0, 2, 1, 3).reshape(B, S, D)
        x = x + o @ s["w_o"][l] + s["b_o"][l, 0]
        h2 = _ref_ln(x, s["ln2_g"][l, 0], s["ln2_b"][l, 0])
        m = h2 @ s["w_fc"][l] + s["b_fc"][l, 0]
        m = m * jax.nn.sigmoid(1.702 * m)
        x = x + m @ s["w_proj"][l] + s["b_proj"][l, 0]
    xf = _ref_ln(x, params["lnf_g"][0], params["lnf_b"][0])
    eot_idx = jnp.argmax(tokenized_prompts, axis=-1)
    return xf[jnp.arange(B), eot_idx] @ params["proj"]


# ------------------------------ deterministic parameter init ------------------------------
def init_params(key):
    ks = jax.random.split(key, 16)
    params = {
        "pos": 0.01 * jax.random.normal(ks[0], (S, D), jnp.float32),
        # CLIP build_attention_mask(): upper-triangular -inf causal mask
        "mask": jnp.where(jnp.triu(jnp.ones((S, S), jnp.bool_), k=1),
                          jnp.float32(NEG_INF), jnp.float32(0.0)),
        "lnf_g": 1.0 + 0.01 * jax.random.normal(ks[1], (1, D), jnp.float32),
        "lnf_b": 0.01 * jax.random.normal(ks[2], (1, D), jnp.float32),
        "proj": (D ** -0.5) * jax.random.normal(ks[3], (D, E), jnp.float32),
        "stk": {
            "ln1_g": 1.0 + 0.01 * jax.random.normal(ks[4], (L, 1, D), jnp.float32),
            "ln1_b": 0.01 * jax.random.normal(ks[5], (L, 1, D), jnp.float32),
            "w_qkv": 0.02 * jax.random.normal(ks[6], (L, 3, D, D), jnp.float32),
            "b_qkv": 0.01 * jax.random.normal(ks[7], (L, 3, 1, D), jnp.float32),
            "w_o": 0.02 * jax.random.normal(ks[8], (L, D, D), jnp.float32),
            "b_o": 0.01 * jax.random.normal(ks[9], (L, 1, D), jnp.float32),
            "ln2_g": 1.0 + 0.01 * jax.random.normal(ks[10], (L, 1, D), jnp.float32),
            "ln2_b": 0.01 * jax.random.normal(ks[11], (L, 1, D), jnp.float32),
            "w_fc": 0.02 * jax.random.normal(ks[12], (L, D, 4 * D), jnp.float32),
            "b_fc": 0.01 * jax.random.normal(ks[13], (L, 1, 4 * D), jnp.float32),
            "w_proj": 0.02 * jax.random.normal(ks[14], (L, 4 * D, D), jnp.float32),
            "b_proj": 0.01 * jax.random.normal(ks[15], (L, 1, D), jnp.float32),
        },
    }
    return params


if __name__ == "__main__":
    key = jax.random.PRNGKey(0)
    k_prompt, k_param = jax.random.split(key)

    # "prompts" are the already-embedded context+class tokens: (B, S, D)
    prompts = 0.02 * jax.random.normal(k_prompt, (B, S, D), jnp.float32)

    # tokenized_prompts: int token ids; EOT token (largest id) marks the row to pool
    eot_pos = jnp.array([5, 7], dtype=jnp.int32)
    tokenized_prompts = jnp.zeros((B, S), jnp.int32).at[jnp.arange(B), eot_pos].set(49407)

    params = init_params(k_param)

    out = text_encoder(prompts, tokenized_prompts, params)
    out = jax.block_until_ready(out)

    assert out.shape == (B, E), out.shape
    assert bool(jnp.all(jnp.isfinite(out)))

    ref = text_encoder_ref(prompts, tokenized_prompts, params)
    assert bool(jnp.allclose(out, ref, atol=1e-4, rtol=1e-4)), (
        float(jnp.max(jnp.abs(out - ref))))
    print("KERNEL_OK")
</pallas_src>

<mosaic_0001>
module attributes {stable_mosaic.version = 11 : i64} {
  func.func @text_encoder_kernel(%arg0: i32, %arg1: memref<2xi32, #tpu.memory_space<smem>>, %arg2: memref<1x8x32xf32, #tpu.memory_space<vmem>>, %arg3: memref<8x32xf32, #tpu.memory_space<vmem>>, %arg4: memref<8x8xf32, #tpu.memory_space<vmem>>, %arg5: memref<2x1x32xf32, #tpu.memory_space<vmem>>, %arg6: memref<2x1x32xf32, #tpu.memory_space<vmem>>, %arg7: memref<2x3x32x32xf32, #tpu.memory_space<vmem>>, %arg8: memref<2x3x1x32xf32, #tpu.memory_space<vmem>>, %arg9: memref<2x32x32xf32, #tpu.memory_space<vmem>>, %arg10: memref<2x1x32xf32, #tpu.memory_space<vmem>>, %arg11: memref<2x1x32xf32, #tpu.memory_space<vmem>>, %arg12: memref<2x1x32xf32, #tpu.memory_space<vmem>>, %arg13: memref<2x32x128xf32, #tpu.memory_space<vmem>>, %arg14: memref<2x1x128xf32, #tpu.memory_space<vmem>>, %arg15: memref<2x128x32xf32, #tpu.memory_space<vmem>>, %arg16: memref<2x1x32xf32, #tpu.memory_space<vmem>>, %arg17: memref<1x32xf32, #tpu.memory_space<vmem>>, %arg18: memref<1x32xf32, #tpu.memory_space<vmem>>, %arg19: memref<32x16xf32, #tpu.memory_space<vmem>>, %arg20: memref<1x1x16xf32, #tpu.memory_space<vmem>>, %arg21: memref<8x32xf32, #tpu.memory_space<vmem>>) attributes {dimension_semantics = [#tpu.dimension_semantics<parallel>], iteration_bounds = array<i64: 2>, scalar_prefetch = 1 : i64, scratch_operands = 1 : i64, tpu.core_type = #tpu.core_type<tc>, window_params = [{transform_indices = @transform_0, window_bounds = array<i64: 1, 8, 32>}, {pipeline_mode = #tpu.pipeline_mode<synchronous>, transform_indices = @transform_1, window_bounds = array<i64: 8, 32>}, {pipeline_mode = #tpu.pipeline_mode<synchronous>, transform_indices = @transform_2, window_bounds = array<i64: 8, 8>}, {pipeline_mode = #tpu.pipeline_mode<synchronous>, transform_indices = @transform_3, window_bounds = array<i64: 2, 1, 32>}, {pipeline_mode = #tpu.pipeline_mode<synchronous>, transform_indices = @transform_4, window_bounds = array<i64: 2, 1, 32>}, {pipeline_mode = #tpu.pipeline_mode<synchronous>, transform_indices = @transform_5, window_bounds = array<i64: 2, 3, 32, 32>}, {pipeline_mode = #tpu.pipeline_mode<synchronous>, transform_indices = @transform_6, window_bounds = array<i64: 2, 3, 1, 32>}, {pipeline_mode = #tpu.pipeline_mode<synchronous>, transform_indices = @transform_7, window_bounds = array<i64: 2, 32, 32>}, {pipeline_mode = #tpu.pipeline_mode<synchronous>, transform_indices = @transform_8, window_bounds = array<i64: 2, 1, 32>}, {pipeline_mode = #tpu.pipeline_mode<synchronous>, transform_indices = @transform_9, window_bounds = array<i64: 2, 1, 32>}, {pipeline_mode = #tpu.pipeline_mode<synchronous>, transform_indices = @transform_10, window_bounds = array<i64: 2, 1, 32>}, {pipeline_mode = #tpu.pipeline_mode<synchronous>, transform_indices = @transform_11, window_bounds = array<i64: 2, 32, 128>}, {pipeline_mode = #tpu.pipeline_mode<synchronous>, transform_indices = @transform_12, window_bounds = array<i64: 2, 1, 128>}, {pipeline_mode = #tpu.pipeline_mode<synchronous>, transform_indices = @transform_13, window_bounds = array<i64: 2, 128, 32>}, {pipeline_mode = #tpu.pipeline_mode<synchronous>, transform_indices = @transform_14, window_bounds = array<i64: 2, 1, 32>}, {pipeline_mode = #tpu.pipeline_mode<synchronous>, transform_indices = @transform_15, window_bounds = array<i64: 1, 32>}, {pipeline_mode = #tpu.pipeline_mode<synchronous>, transform_indices = @transform_16, window_bounds = array<i64: 1, 32>}, {pipeline_mode = #tpu.pipeline_mode<synchronous>, transform_indices = @transform_17, window_bounds = array<i64: 32, 16>}, {transform_indices = @transform_18, window_bounds = array<i64: 1, 1, 16>}]} {
    %c0 = arith.constant 0 : index
    %c0_0 = arith.constant 0 : index
    %0 = vector.load %arg4[%c0, %c0_0] : memref<8x8xf32, #tpu.memory_space<vmem>>, vector<8x8xf32>
    %c0_1 = arith.constant 0 : index
    %c0_2 = arith.constant 0 : index
    %c0_3 = arith.constant 0 : index
    %1 = vector.load %arg2[%c0_1, %c0_2, %c0_3] : memref<1x8x32xf32, #tpu.memory_space<vmem>>, vector<1x8x32xf32>
    %2 = vector.shape_cast %1 : vector<1x8x32xf32> to vector<8x32xf32>
    %c0_4 = arith.constant 0 : index
    %c0_5 = arith.constant 0 : index
    %3 = vector.load %arg3[%c0_4, %c0_5] : memref<8x32xf32, #tpu.memory_space<vmem>>, vector<8x32xf32>
    %4 = arith.addf %2, %3 : vector<8x32xf32>
    %c0_6 = arith.constant 0 : index
    %c0_7 = arith.constant 0 : index
    %c0_8 = arith.constant 0 : index
    %5 = vector.load %arg5[%c0_6, %c0_7, %c0_8] : memref<2x1x32xf32, #tpu.memory_space<vmem>>, vector<1x1x32xf32>
    %6 = vector.shape_cast %5 : vector<1x1x32xf32> to vector<1x32xf32>
    %c0_9 = arith.constant 0 : index
    %c0_10 = arith.constant 0 : index
    %c0_11 = arith.constant 0 : index
    %7 = vector.load %arg6[%c0_9, %c0_10, %c0_11] : memref<2x1x32xf32, #tpu.memory_space<vmem>>, vector<1x1x32xf32>
    %8 = vector.shape_cast %7 : vector<1x1x32xf32> to vector<1x32xf32>
    %cst = arith.constant dense<0.000000e+00> : vector<8xf32>
    %9 = vector.multi_reduction <add>, %4, %cst [1] : vector<8x32xf32> to vector<8xf32>
    %10 = vector.shape_cast %9 : vector<8xf32> to vector<8x1xf32>
    %cst_12 = arith.constant 3.200000e+01 : f32
    %11 = vector.broadcast %cst_12 : f32 to vector<8x1xf32>
    %12 = arith.divf %10, %11 : vector<8x1xf32>
    %13 = vector.broadcast %12 : vector<8x1xf32> to vector<8x32xf32>
    %14 = arith.subf %4, %13 : vector<8x32xf32>
    %15 = arith.mulf %14, %14 : vector<8x32xf32>
    %cst_13 = arith.constant dense<0.000000e+00> : vector<8xf32>
    %16 = vector.multi_reduction <add>, %15, %cst_13 [1] : vector<8x32xf32> to vector<8xf32>
    %17 = vector.shape_cast %16 : vector<8xf32> to vector<8x1xf32>
    %cst_14 = arith.constant 3.200000e+01 : f32
    %18 = vector.broadcast %cst_14 : f32 to vector<8x1xf32>
    %19 = arith.divf %17, %18 : vector<8x1xf32>
    %20 = vector.broadcast %12 : vector<8x1xf32> to vector<8x32xf32>
    %21 = arith.subf %4, %20 : vector<8x32xf32>
    %cst_15 = arith.constant 9.99999974E-6 : f32
    %22 = vector.broadcast %cst_15 : f32 to vector<8x1xf32>
    %23 = arith.addf %19, %22 : vector<8x1xf32>
    %24 = math.rsqrt %23 : vector<8x1xf32>
    %25 = vector.broadcast %24 : vector<8x1xf32> to vector<8x32xf32>
    %26 = arith.mulf %21, %25 : vector<8x32xf32>
    %27 = vector.broadcast %6 : vector<1x32xf32> to vector<8x32xf32>
    %28 = arith.mulf %26, %27 : vector<8x32xf32>
    %29 = vector.broadcast %8 : vector<1x32xf32> to vector<8x32xf32>
    %30 = arith.addf %28, %29 : vector<8x32xf32>
    %c0_16 = arith.constant 0 : index
    %c0_17 = arith.constant 0 : index
    %c0_18 = arith.constant 0 : index
    %c0_19 = arith.constant 0 : index
    %31 = vector.load %arg7[%c0_16, %c0_17, %c0_18, %c0_19] : memref<2x3x32x32xf32, #tpu.memory_space<vmem>>, vector<1x1x32x32xf32>
    %32 = vector.shape_cast %31 : vector<1x1x32x32xf32> to vector<32x32xf32>
    %cst_20 = arith.constant dense<0.000000e+00> : vector<8x32xf32>
    %33 = tpu.matmul %30, %32, %cst_20 {dimension_numbers = #tpu.dot_dimension_numbers<[1], [0], [0], [1], [0, 0, 1, 1], [], []>} : vector<8x32xf32>, vector<32x32xf32>, vector<8x32xf32> -> vector<8x32xf32>
    %c0_21 = arith.constant 0 : index
    %c0_22 = arith.constant 0 : index
    %c0_23 = arith.constant 0 : index
    %c0_24 = arith.constant 0 : index
    %34 = vector.load %arg8[%c0_21, %c0_22, %c0_23, %c0_24] : memref<2x3x1x32xf32, #tpu.memory_space<vmem>>, vector<1x1x1x32xf32>
    %35 = vector.shape_cast %34 : vector<1x1x1x32xf32> to vector<1x32xf32>
    %36 = vector.broadcast %35 : vector<1x32xf32> to vector<8x32xf32>
    %37 = arith.addf %33, %36 : vector<8x32xf32>
    %c0_25 = arith.constant 0 : index
    %c1 = arith.constant 1 : index
    %c0_26 = arith.constant 0 : index
    %c0_27 = arith.constant 0 : index
    %38 = vector.load %arg7[%c0_25, %c1, %c0_26, %c0_27] : memref<2x3x32x32xf32, #tpu.memory_space<vmem>>, vector<1x1x32x32xf32>
    %39 = vector.shape_cast %38 : vector<1x1x32x32xf32> to vector<32x32xf32>
    %cst_28 = arith.constant dense<0.000000e+00> : vector<8x32xf32>
    %40 = tpu.matmul %30, %39, %cst_28 {dimension_numbers = #tpu.dot_dimension_numbers<[1], [0], [0], [1], [0, 0, 1, 1], [], []>} : vector<8x32xf32>, vector<32x32xf32>, vector<8x32xf32> -> vector<8x32xf32>
    %c0_29 = arith.constant 0 : index
    %c1_30 = arith.constant 1 : index
    %c0_31 = arith.constant 0 : index
    %c0_32 = arith.constant 0 : index
    %41 = vector.load %arg8[%c0_29, %c1_30, %c0_31, %c0_32] : memref<2x3x1x32xf32, #tpu.memory_space<vmem>>, vector<1x1x1x32xf32>
    %42 = vector.shape_cast %41 : vector<1x1x1x32xf32> to vector<1x32xf32>
    %43 = vector.broadcast %42 : vector<1x32xf32> to vector<8x32xf32>
    %44 = arith.addf %40, %43 : vector<8x32xf32>
    %c0_33 = arith.constant 0 : index
    %c2 = arith.constant 2 : index
    %c0_34 = arith.constant 0 : index
    %c0_35 = arith.constant 0 : index
    %45 = vector.load %arg7[%c0_33, %c2, %c0_34, %c0_35] : memref<2x3x32x32xf32, #tpu.memory_space<vmem>>, vector<1x1x32x32xf32>
    %46 = vector.shape_cast %45 : vector<1x1x32x32xf32> to vector<32x32xf32>
    %cst_36 = arith.constant dense<0.000000e+00> : vector<8x32xf32>
    %47 = tpu.matmul %30, %46, %cst_36 {dimension_numbers = #tpu.dot_dimension_numbers<[1], [0], [0], [1], [0, 0, 1, 1], [], []>} : vector<8x32xf32>, vector<32x32xf32>, vector<8x32xf32> -> vector<8x32xf32>
    %c0_37 = arith.constant 0 : index
    %c2_38 = arith.constant 2 : index
    %c0_39 = arith.constant 0 : index
    %c0_40 = arith.constant 0 : index
    %48 = vector.load %arg8[%c0_37, %c2_38, %c0_39, %c0_40] : memref<2x3x1x32xf32, #tpu.memory_space<vmem>>, vector<1x1x1x32xf32>
    %49 = vector.shape_cast %48 : vector<1x1x1x32xf32> to vector<1x32xf32>
    %50 = vector.broadcast %49 : vector<1x32xf32> to vector<8x32xf32>
    %51 = arith.addf %47, %50 : vector<8x32xf32>
    %52 = vector.extract_strided_slice %37 {offsets = [0, 0], sizes = [8, 8], strides = [1, 1]} : vector<8x32xf32> to vector<8x8xf32>
    %53 = vector.extract_strided_slice %44 {offsets = [0, 0], sizes = [8, 8], strides = [1, 1]} : vector<8x32xf32> to vector<8x8xf32>
    %cst_41 = arith.constant dense<0.000000e+00> : vector<8x8xf32>
    %54 = tpu.matmul %52, %53, %cst_41 {dimension_numbers = #tpu.dot_dimension_numbers<[1], [1], [0], [0], [0, 0, 1, 0], [], []>} : vector<8x8xf32>, vector<8x8xf32>, vector<8x8xf32> -> vector<8x8xf32>
    %cst_42 = arith.constant 0.353553385 : f32
    %55 = vector.broadcast %cst_42 : f32 to vector<8x8xf32>
    %56 = arith.mulf %54, %55 : vector<8x8xf32>
    %57 = arith.addf %56, %0 : vector<8x8xf32>
    %58 = vector.extract_strided_slice %37 {offsets = [0, 8], sizes = [8, 8], strides = [1, 1]} : vector<8x32xf32> to vector<8x8xf32>
    %59 = vector.extract_strided_slice %44 {offsets = [0, 8], sizes = [8, 8], strides = [1, 1]} : vector<8x32xf32> to vector<8x8xf32>
    %cst_43 = arith.constant dense<0.000000e+00> : vector<8x8xf32>
    %60 = tpu.matmul %58, %59, %cst_43 {dimension_numbers = #tpu.dot_dimension_numbers<[1], [1], [0], [0], [0, 0, 1, 0], [], []>} : vector<8x8xf32>, vector<8x8xf32>, vector<8x8xf32> -> vector<8x8xf32>
    %cst_44 = arith.constant 0.353553385 : f32
    %61 = vector.broadcast %cst_44 : f32 to vector<8x8xf32>
    %62 = arith.mulf %60, %61 : vector<8x8xf32>
    %63 = arith.addf %62, %0 : vector<8x8xf32>
    %64 = vector.extract_strided_slice %37 {offsets = [0, 16], sizes = [8, 8], strides = [1, 1]} : vector<8x32xf32> to vector<8x8xf32>
    %65 = vector.extract_strided_slice %44 {offsets = [0, 16], sizes = [8, 8], strides = [1, 1]} : vector<8x32xf32> to vector<8x8xf32>
    %cst_45 = arith.constant dense<0.000000e+00> : vector<8x8xf32>
    %66 = tpu.matmul %64, %65, %cst_45 {dimension_numbers = #tpu.dot_dimension_numbers<[1], [1], [0], [0], [0, 0, 1, 0], [], []>} : vector<8x8xf32>, vector<8x8xf32>, vector<8x8xf32> -> vector<8x8xf32>
    %cst_46 = arith.constant 0.353553385 : f32
    %67 = vector.broadcast %cst_46 : f32 to vector<8x8xf32>
    %68 = arith.mulf %66, %67 : vector<8x8xf32>
    %69 = arith.addf %68, %0 : vector<8x8xf32>
    %70 = vector.extract_strided_slice %37 {offsets = [0, 24], sizes = [8, 8], strides = [1, 1]} : vector<8x32xf32> to vector<8x8xf32>
    %71 = vector.extract_strided_slice %44 {offsets = [0, 24], sizes = [8, 8], strides = [1, 1]} : vector<8x32xf32> to vector<8x8xf32>
    %cst_47 = arith.constant dense<0.000000e+00> : vector<8x8xf32>
    %72 = tpu.matmul %70, %71, %cst_47 {dimension_numbers = #tpu.dot_dimension_numbers<[1], [1], [0], [0], [0, 0, 1, 0], [], []>} : vector<8x8xf32>, vector<8x8xf32>, vector<8x8xf32> -> vector<8x8xf32>
    %cst_48 = arith.constant 0.353553385 : f32
    %73 = vector.broadcast %cst_48 : f32 to vector<8x8xf32>
    %74 = arith.mulf %72, %73 : vector<8x8xf32>
    %75 = arith.addf %74, %0 : vector<8x8xf32>
    %76 = tpu.concatenate %57, %63, %69, %75 in 0 : vector<8x8xf32>, vector<8x8xf32>, vector<8x8xf32>, vector<8x8xf32> -> vector<32x8xf32>
    %cst_49 = arith.constant dense<0xFF800000> : vector<32xf32>
    %77 = vector.multi_reduction <maximumf>, %76, %cst_49 [1] : vector<32x8xf32> to vector<32xf32>
    %78 = vector.shape_cast %77 : vector<32xf32> to vector<32x1xf32>
    %79 = vector.broadcast %78 : vector<32x1xf32> to vector<32x8xf32>
    %80 = arith.subf %76, %79 : vector<32x8xf32>
    %81 = math.exp %80 : vector<32x8xf32>
    %cst_50 = arith.constant dense<0.000000e+00> : vector<32xf32>
    %82 = vector.multi_reduction <add>, %81, %cst_50 [1] : vector<32x8xf32> to vector<32xf32>
    %83 = vector.shape_cast %82 : vector<32xf32> to vector<32x1xf32>
    %84 = vector.broadcast %83 : vector<32x1xf32> to vector<32x8xf32>
    %85 = arith.divf %81, %84 : vector<32x8xf32>
    %86 = vector.extract_strided_slice %85 {offsets = [0, 0], sizes = [8, 8], strides = [1, 1]} : vector<32x8xf32> to vector<8x8xf32>
    %87 = vector.extract_strided_slice %51 {offsets = [0, 0], sizes = [8, 8], strides = [1, 1]} : vector<8x32xf32> to vector<8x8xf32>
    %cst_51 = arith.constant dense<0.000000e+00> : vector<8x8xf32>
    %88 = tpu.matmul %86, %87, %cst_51 {dimension_numbers = #tpu.dot_dimension_numbers<[1], [0], [0], [1], [0, 0, 1, 1], [], []>} : vector<8x8xf32>, vector<8x8xf32>, vector<8x8xf32> -> vector<8x8xf32>
    %89 = vector.extract_strided_slice %85 {offsets = [8, 0], sizes = [8, 8], strides = [1, 1]} : vector<32x8xf32> to vector<8x8xf32>
    %90 = vector.extract_strided_slice %51 {offsets = [0, 8], sizes = [8, 8], strides = [1, 1]} : vector<8x32xf32> to vector<8x8xf32>
    %cst_52 = arith.constant dense<0.000000e+00> : vector<8x8xf32>
    %91 = tpu.matmul %89, %90, %cst_52 {dimension_numbers = #tpu.dot_dimension_numbers<[1], [0], [0], [1], [0, 0, 1, 1], [], []>} : vector<8x8xf32>, vector<8x8xf32>, vector<8x8xf32> -> vector<8x8xf32>
    %92 = vector.extract_strided_slice %85 {offsets = [16, 0], sizes = [8, 8], strides = [1, 1]} : vector<32x8xf32> to vector<8x8xf32>
    %93 = vector.extract_strided_slice %51 {offsets = [0, 16], sizes = [8, 8], strides = [1, 1]} : vector<8x32xf32> to vector<8x8xf32>
    %cst_53 = arith.constant dense<0.000000e+00> : vector<8x8xf32>
    %94 = tpu.matmul %92, %93, %cst_53 {dimension_numbers = #tpu.dot_dimension_numbers<[1], [0], [0], [1], [0, 0, 1, 1], [], []>} : vector<8x8xf32>, vector<8x8xf32>, vector<8x8xf32> -> vector<8x8xf32>
    %95 = vector.extract_strided_slice %85 {offsets = [24, 0], sizes = [8, 8], strides = [1, 1]} : vector<32x8xf32> to vector<8x8xf32>
    %96 = vector.extract_strided_slice %51 {offsets = [0, 24], sizes = [8, 8], strides = [1, 1]} : vector<8x32xf32> to vector<8x8xf32>
    %cst_54 = arith.constant dense<0.000000e+00> : vector<8x8xf32>
    %97 = tpu.matmul %95, %96, %cst_54 {dimension_numbers = #tpu.dot_dimension_numbers<[1], [0], [0], [1], [0, 0, 1, 1], [], []>} : vector<8x8xf32>, vector<8x8xf32>, vector<8x8xf32> -> vector<8x8xf32>
    %98 = tpu.concatenate %88, %91, %94, %97 in 1 : vector<8x8xf32>, vector<8x8xf32>, vector<8x8xf32>, vector<8x8xf32> -> vector<8x32xf32>
    %c0_55 = arith.constant 0 : index
    %c0_56 = arith.constant 0 : index
    %c0_57 = arith.constant 0 : index
    %99 = vector.load %arg9[%c0_55, %c0_56, %c0_57] : memref<2x32x32xf32, #tpu.memory_space<vmem>>, vector<1x32x32xf32>
    %100 = vector.shape_cast %99 : vector<1x32x32xf32> to vector<32x32xf32>
    %cst_58 = arith.constant dense<0.000000e+00> : vector<8x32xf32>
    %101 = tpu.matmul %98, %100, %cst_58 {dimension_numbers = #tpu.dot_dimension_numbers<[1], [0], [0], [1], [0, 0, 1, 1], [], []>} : vector<8x32xf32>, vector<32x32xf32>, vector<8x32xf32> -> vector<8x32xf32>
    %102 = arith.addf %4, %101 : vector<8x32xf32>
    %c0_59 = arith.constant 0 : index
    %c0_60 = arith.constant 0 : index
    %c0_61 = arith.constant 0 : index
    %103 = vector.load %arg10[%c0_59, %c0_60, %c0_61] : memref<2x1x32xf32, #tpu.memory_space<vmem>>, vector<1x1x32xf32>
    %104 = vector.shape_cast %103 : vector<1x1x32xf32> to vector<1x32xf32>
    %105 = vector.broadcast %104 : vector<1x32xf32> to vector<8x32xf32>
    %106 = arith.addf %102, %105 : vector<8x32xf32>
    %c0_62 = arith.constant 0 : index
    %c0_63 = arith.constant 0 : index
    %c0_64 = arith.constant 0 : index
    %107 = vector.load %arg11[%c0_62, %c0_63, %c0_64] : memref<2x1x32xf32, #tpu.memory_space<vmem>>, vector<1x1x32xf32>
    %108 = vector.shape_cast %107 : vector<1x1x32xf32> to vector<1x32xf32>
    %c0_65 = arith.constant 0 : index
    %c0_66 = arith.constant 0 : index
    %c0_67 = arith.constant 0 : index
    %109 = vector.load %arg12[%c0_65, %c0_66, %c0_67] : memref<2x1x32xf32, #tpu.memory_space<vmem>>, vector<1x1x32xf32>
    %110 = vector.shape_cast %109 : vector<1x1x32xf32> to vector<1x32xf32>
    %cst_68 = arith.constant dense<0.000000e+00> : vector<8xf32>
    %111 = vector.multi_reduction <add>, %106, %cst_68 [1] : vector<8x32xf32> to vector<8xf32>
    %112 = vector.shape_cast %111 : vector<8xf32> to vector<8x1xf32>
    %cst_69 = arith.constant 3.200000e+01 : f32
    %113 = vector.broadcast %cst_69 : f32 to vector<8x1xf32>
    %114 = arith.divf %112, %113 : vector<8x1xf32>
    %115 = vector.broadcast %114 : vector<8x1xf32> to vector<8x32xf32>
    %116 = arith.subf %106, %115 : vector<8x32xf32>
    %117 = arith.mulf %116, %116 : vector<8x32xf32>
    %cst_70 = arith.constant dense<0.000000e+00> : vector<8xf32>
    %118 = vector.multi_reduction <add>, %117, %cst_70 [1] : vector<8x32xf32> to vector<8xf32>
    %119 = vector.shape_cast %118 : vector<8xf32> to vector<8x1xf32>
    %cst_71 = arith.constant 3.200000e+01 : f32
    %120 = vector.broadcast %cst_71 : f32 to vector<8x1xf32>
    %121 = arith.divf %119, %120 : vector<8x1xf32>
    %122 = vector.broadcast %114 : vector<8x1xf32> to vector<8x32xf32>
    %123 = arith.subf %106, %122 : vector<8x32xf32>
    %cst_72 = arith.constant 9.99999974E-6 : f32
    %124 = vector.broadcast %cst_72 : f32 to vector<8x1xf32>
    %125 = arith.addf %121, %124 : vector<8x1xf32>
    %126 = math.rsqrt %125 : vector<8x1xf32>
    %127 = vector.broadcast %126 : vector<8x1xf32> to vector<8x32xf32>
    %128 = arith.mulf %123, %127 : vector<8x32xf32>
    %129 = vector.broadcast %108 : vector<1x32xf32> to vector<8x32xf32>
    %130 = arith.mulf %128, %129 : vector<8x32xf32>
    %131 = vector.broadcast %110 : vector<1x32xf32> to vector<8x32xf32>
    %132 = arith.addf %130, %131 : vector<8x32xf32>
    %c0_73 = arith.constant 0 : index
    %c0_74 = arith.constant 0 : index
    %c0_75 = arith.constant 0 : index
    %133 = vector.load %arg13[%c0_73, %c0_74, %c0_75] : memref<2x32x128xf32, #tpu.memory_space<vmem>>, vector<1x32x128xf32>
    %134 = vector.shape_cast %133 : vector<1x32x128xf32> to vector<32x128xf32>
    %cst_76 = arith.constant dense<0.000000e+00> : vector<8x128xf32>
    %135 = tpu.matmul %132, %134, %cst_76 {dimension_numbers = #tpu.dot_dimension_numbers<[1], [0], [0], [1], [0, 0, 1, 1], [], []>} : vector<8x32xf32>, vector<32x128xf32>, vector<8x128xf32> -> vector<8x128xf32>
    %c0_77 = arith.constant 0 : index
    %c0_78 = arith.constant 0 : index
    %c0_79 = arith.constant 0 : index
    %136 = vector.load %arg14[%c0_77, %c0_78, %c0_79] : memref<2x1x128xf32, #tpu.memory_space<vmem>>, vector<1x1x128xf32>
    %137 = vector.shape_cast %136 : vector<1x1x128xf32> to vector<1x128xf32>
    %138 = vector.broadcast %137 : vector<1x128xf32> to vector<8x128xf32>
    %139 = arith.addf %135, %138 : vector<8x128xf32>
    %cst_80 = arith.constant 1.702000e+00 : f32
    %140 = vector.broadcast %cst_80 : f32 to vector<8x128xf32>
    %141 = arith.mulf %140, %139 : vector<8x128xf32>
    %142 = arith.negf %141 : vector<8x128xf32>
    %143 = math.exp %142 : vector<8x128xf32>
    %cst_81 = arith.constant 1.000000e+00 : f32
    %144 = vector.broadcast %cst_81 : f32 to vector<8x128xf32>
    %145 = arith.addf %144, %143 : vector<8x128xf32>
    %146 = arith.divf %144, %145 : vector<8x128xf32>
    %147 = arith.mulf %139, %146 : vector<8x128xf32>
    %c0_82 = arith.constant 0 : index
    %c0_83 = arith.constant 0 : index
    %c0_84 = arith.constant 0 : index
    %148 = vector.load %arg15[%c0_82, %c0_83, %c0_84] : memref<2x128x32xf32, #tpu.memory_space<vmem>>, vector<1x128x32xf32>
    %149 = vector.shape_cast %148 : vector<1x128x32xf32> to vector<128x32xf32>
    %cst_85 = arith.constant dense<0.000000e+00> : vector<8x32xf32>
    %150 = tpu.matmul %147, %149, %cst_85 {dimension_numbers = #tpu.dot_dimension_numbers<[1], [0], [0], [1], [0, 0, 1, 1], [], []>} : vector<8x128xf32>, vector<128x32xf32>, vector<8x32xf32> -> vector<8x32xf32>
    %151 = arith.addf %106, %150 : vector<8x32xf32>
    %c0_86 = arith.constant 0 : index
    %c0_87 = arith.constant 0 : index
    %c0_88 = arith.constant 0 : index
    %152 = vector.load %arg16[%c0_86, %c0_87, %c0_88] : memref<2x1x32xf32, #tpu.memory_space<vmem>>, vector<1x1x32xf32>
    %153 = vector.shape_cast %152 : vector<1x1x32xf32> to vector<1x32xf32>
    %154 = vector.broadcast %153 : vector<1x32xf32> to vector<8x32xf32>
    %155 = arith.addf %151, %154 : vector<8x32xf32>
    %c1_89 = arith.constant 1 : index
    %c0_90 = arith.constant 0 : index
    %c0_91 = arith.constant 0 : index
    %156 = vector.load %arg5[%c1_89, %c0_90, %c0_91] : memref<2x1x32xf32, #tpu.memory_space<vmem>>, vector<1x1x32xf32>
    %157 = vector.shape_cast %156 : vector<1x1x32xf32> to vector<1x32xf32>
    %c1_92 = arith.constant 1 : index
    %c0_93 = arith.constant 0 : index
    %c0_94 = arith.constant 0 : index
    %158 = vector.load %arg6[%c1_92, %c0_93, %c0_94] : memref<2x1x32xf32, #tpu.memory_space<vmem>>, vector<1x1x32xf32>
    %159 = vector.shape_cast %158 : vector<1x1x32xf32> to vector<1x32xf32>
    %cst_95 = arith.constant dense<0.000000e+00> : vector<8xf32>
    %160 = vector.multi_reduction <add>, %155, %cst_95 [1] : vector<8x32xf32> to vector<8xf32>
    %161 = vector.shape_cast %160 : vector<8xf32> to vector<8x1xf32>
    %cst_96 = arith.constant 3.200000e+01 : f32
    %162 = vector.broadcast %cst_96 : f32 to vector<8x1xf32>
    %163 = arith.divf %161, %162 : vector<8x1xf32>
    %164 = vector.broadcast %163 : vector<8x1xf32> to vector<8x32xf32>
    %165 = arith.subf %155, %164 : vector<8x32xf32>
    %166 = arith.mulf %165, %165 : vector<8x32xf32>
    %cst_97 = arith.constant dense<0.000000e+00> : vector<8xf32>
    %167 = vector.multi_reduction <add>, %166, %cst_97 [1] : vector<8x32xf32> to vector<8xf32>
    %168 = vector.shape_cast %167 : vector<8xf32> to vector<8x1xf32>
    %cst_98 = arith.constant 3.200000e+01 : f32
    %169 = vector.broadcast %cst_98 : f32 to vector<8x1xf32>
    %170 = arith.divf %168, %169 : vector<8x1xf32>
    %171 = vector.broadcast %163 : vector<8x1xf32> to vector<8x32xf32>
    %172 = arith.subf %155, %171 : vector<8x32xf32>
    %cst_99 = arith.constant 9.99999974E-6 : f32
    %173 = vector.broadcast %cst_99 : f32 to vector<8x1xf32>
    %174 = arith.addf %170, %173 : vector<8x1xf32>
    %175 = math.rsqrt %174 : vector<8x1xf32>
    %176 = vector.broadcast %175 : vector<8x1xf32> to vector<8x32xf32>
    %177 = arith.mulf %172, %176 : vector<8x32xf32>
    %178 = vector.broadcast %157 : vector<1x32xf32> to vector<8x32xf32>
    %179 = arith.mulf %177, %178 : vector<8x32xf32>
    %180 = vector.broadcast %159 : vector<1x32xf32> to vector<8x32xf32>
    %181 = arith.addf %179, %180 : vector<8x32xf32>
    %c1_100 = arith.constant 1 : index
    %c0_101 = arith.constant 0 : index
    %c0_102 = arith.constant 0 : index
    %c0_103 = arith.constant 0 : index
    %182 = vector.load %arg7[%c1_100, %c0_101, %c0_102, %c0_103] : memref<2x3x32x32xf32, #tpu.memory_space<vmem>>, vector<1x1x32x32xf32>
    %183 = vector.shape_cast %182 : vector<1x1x32x32xf32> to vector<32x32xf32>
    %cst_104 = arith.constant dense<0.000000e+00> : vector<8x32xf32>
    %184 = tpu.matmul %181, %183, %cst_104 {dimension_numbers = #tpu.dot_dimension_numbers<[1], [0], [0], [1], [0, 0, 1, 1], [], []>} : vector<8x32xf32>, vector<32x32xf32>, vector<8x32xf32> -> vector<8x32xf32>
    %c1_105 = arith.constant 1 : index
    %c0_106 = arith.constant 0 : index
    %c0_107 = arith.constant 0 : index
    %c0_108 = arith.constant 0 : index
    %185 = vector.load %arg8[%c1_105, %c0_106, %c0_107, %c0_108] : memref<2x3x1x32xf32, #tpu.memory_space<vmem>>, vector<1x1x1x32xf32>
    %186 = vector.shape_cast %185 : vector<1x1x1x32xf32> to vector<1x32xf32>
    %187 = vector.broadcast %186 : vector<1x32xf32> to vector<8x32xf32>
    %188 = arith.addf %184, %187 : vector<8x32xf32>
    %c1_109 = arith.constant 1 : index
    %c1_110 = arith.constant 1 : index
    %c0_111 = arith.constant 0 : index
    %c0_112 = arith.constant 0 : index
    %189 = vector.load %arg7[%c1_109, %c1_110, %c0_111, %c0_112] : memref<2x3x32x32xf32, #tpu.memory_space<vmem>>, vector<1x1x32x32xf32>
    %190 = vector.shape_cast %189 : vector<1x1x32x32xf32> to vector<32x32xf32>
    %cst_113 = arith.constant dense<0.000000e+00> : vector<8x32xf32>
    %191 = tpu.matmul %181, %190, %cst_113 {dimension_numbers = #tpu.dot_dimension_numbers<[1], [0], [0], [1], [0, 0, 1, 1], [], []>} : vector<8x32xf32>, vector<32x32xf32>, vector<8x32xf32> -> vector<8x32xf32>
    %c1_114 = arith.constant 1 : index
    %c1_115 = arith.constant 1 : index
    %c0_116 = arith.constant 0 : index
    %c0_117 = arith.constant 0 : index
    %192 = vector.load %arg8[%c1_114, %c1_115, %c0_116, %c0_117] : memref<2x3x1x32xf32, #tpu.memory_space<vmem>>, vector<1x1x1x32xf32>
    %193 = vector.shape_cast %192 : vector<1x1x1x32xf32> to vector<1x32xf32>
    %194 = vector.broadcast %193 : vector<1x32xf32> to vector<8x32xf32>
    %195 = arith.addf %191, %194 : vector<8x32xf32>
    %c1_118 = arith.constant 1 : index
    %c2_119 = arith.constant 2 : index
    %c0_120 = arith.constant 0 : index
    %c0_121 = arith.constant 0 : index
    %196 = vector.load %arg7[%c1_118, %c2_119, %c0_120, %c0_121] : memref<2x3x32x32xf32, #tpu.memory_space<vmem>>, vector<1x1x32x32xf32>
    %197 = vector.shape_cast %196 : vector<1x1x32x32xf32> to vector<32x32xf32>
    %cst_122 = arith.constant dense<0.000000e+00> : vector<8x32xf32>
    %198 = tpu.matmul %181, %197, %cst_122 {dimension_numbers = #tpu.dot_dimension_numbers<[1], [0], [0], [1], [0, 0, 1, 1], [], []>} : vector<8x32xf32>, vector<32x32xf32>, vector<8x32xf32> -> vector<8x32xf32>
    %c1_123 = arith.constant 1 : index
    %c2_124 = arith.constant 2 : index
    %c0_125 = arith.constant 0 : index
    %c0_126 = arith.constant 0 : index
    %199 = vector.load %arg8[%c1_123, %c2_124, %c0_125, %c0_126] : memref<2x3x1x32xf32, #tpu.memory_space<vmem>>, vector<1x1x1x32xf32>
    %200 = vector.shape_cast %199 : vector<1x1x1x32xf32> to vector<1x32xf32>
    %201 = vector.broadcast %200 : vector<1x32xf32> to vector<8x32xf32>
    %202 = arith.addf %198, %201 : vector<8x32xf32>
    %203 = vector.extract_strided_slice %188 {offsets = [0, 0], sizes = [8, 8], strides = [1, 1]} : vector<8x32xf32> to vector<8x8xf32>
    %204 = vector.extract_strided_slice %195 {offsets = [0, 0], sizes = [8, 8], strides = [1, 1]} : vector<8x32xf32> to vector<8x8xf32>
    %cst_127 = arith.constant dense<0.000000e+00> : vector<8x8xf32>
    %205 = tpu.matmul %203, %204, %cst_127 {dimension_numbers = #tpu.dot_dimension_numbers<[1], [1], [0], [0], [0, 0, 1, 0], [], []>} : vector<8x8xf32>, vector<8x8xf32>, vector<8x8xf32> -> vector<8x8xf32>
    %cst_128 = arith.constant 0.353553385 : f32
    %206 = vector.broadcast %cst_128 : f32 to vector<8x8xf32>
    %207 = arith.mulf %205, %206 : vector<8x8xf32>
    %208 = arith.addf %207, %0 : vector<8x8xf32>
    %209 = vector.extract_strided_slice %188 {offsets = [0, 8], sizes = [8, 8], strides = [1, 1]} : vector<8x32xf32> to vector<8x8xf32>
    %210 = vector.extract_strided_slice %195 {offsets = [0, 8], sizes = [8, 8], strides = [1, 1]} : vector<8x32xf32> to vector<8x8xf32>
    %cst_129 = arith.constant dense<0.000000e+00> : vector<8x8xf32>
    %211 = tpu.matmul %209, %210, %cst_129 {dimension_numbers = #tpu.dot_dimension_numbers<[1], [1], [0], [0], [0, 0, 1, 0], [], []>} : vector<8x8xf32>, vector<8x8xf32>, vector<8x8xf32> -> vector<8x8xf32>
    %cst_130 = arith.constant 0.353553385 : f32
    %212 = vector.broadcast %cst_130 : f32 to vector<8x8xf32>
    %213 = arith.mulf %211, %212 : vector<8x8xf32>
    %214 = arith.addf %213, %0 : vector<8x8xf32>
    %215 = vector.extract_strided_slice %188 {offsets = [0, 16], sizes = [8, 8], strides = [1, 1]} : vector<8x32xf32> to vector<8x8xf32>
    %216 = vector.extract_strided_slice %195 {offsets = [0, 16], sizes = [8, 8], strides = [1, 1]} : vector<8x32xf32> to vector<8x8xf32>
    %cst_131 = arith.constant dense<0.000000e+00> : vector<8x8xf32>
    %217 = tpu.matmul %215, %216, %cst_131 {dimension_numbers = #tpu.dot_dimension_numbers<[1], [1], [0], [0], [0, 0, 1, 0], [], []>} : vector<8x8xf32>, vector<8x8xf32>, vector<8x8xf32> -> vector<8x8xf32>
    %cst_132 = arith.constant 0.353553385 : f32
    %218 = vector.broadcast %cst_132 : f32 to vector<8x8xf32>
    %219 = arith.mulf %217, %218 : vector<8x8xf32>
    %220 = arith.addf %219, %0 : vector<8x8xf32>
    %221 = vector.extract_strided_slice %188 {offsets = [0, 24], sizes = [8, 8], strides = [1, 1]} : vector<8x32xf32> to vector<8x8xf32>
    %222 = vector.extract_strided_slice %195 {offsets = [0, 24], sizes = [8, 8], strides = [1, 1]} : vector<8x32xf32> to vector<8x8xf32>
    %cst_133 = arith.constant dense<0.000000e+00> : vector<8x8xf32>
    %223 = tpu.matmul %221, %222, %cst_133 {dimension_numbers = #tpu.dot_dimension_numbers<[1], [1], [0], [0], [0, 0, 1, 0], [], []>} : vector<8x8xf32>, vector<8x8xf32>, vector<8x8xf32> -> vector<8x8xf32>
    %cst_134 = arith.constant 0.353553385 : f32
    %224 = vector.broadcast %cst_134 : f32 to vector<8x8xf32>
    %225 = arith.mulf %223, %224 : vector<8x8xf32>
    %226 = arith.addf %225, %0 : vector<8x8xf32>
    %227 = tpu.concatenate %208, %214, %220, %226 in 0 : vector<8x8xf32>, vector<8x8xf32>, vector<8x8xf32>, vector<8x8xf32> -> vector<32x8xf32>
    %cst_135 = arith.constant dense<0xFF800000> : vector<32xf32>
    %228 = vector.multi_reduction <maximumf>, %227, %cst_135 [1] : vector<32x8xf32> to vector<32xf32>
    %229 = vector.shape_cast %228 : vector<32xf32> to vector<32x1xf32>
    %230 = vector.broadcast %229 : vector<32x1xf32> to vector<32x8xf32>
    %231 = arith.subf %227, %230 : vector<32x8xf32>
    %232 = math.exp %231 : vector<32x8xf32>
    %cst_136 = arith.constant dense<0.000000e+00> : vector<32xf32>
    %233 = vector.multi_reduction <add>, %232, %cst_136 [1] : vector<32x8xf32> to vector<32xf32>
    %234 = vector.shape_cast %233 : vector<32xf32> to vector<32x1xf32>
    %235 = vector.broadcast %234 : vector<32x1xf32> to vector<32x8xf32>
    %236 = arith.divf %232, %235 : vector<32x8xf32>
    %237 = vector.extract_strided_slice %236 {offsets = [0, 0], sizes = [8, 8], strides = [1, 1]} : vector<32x8xf32> to vector<8x8xf32>
    %238 = vector.extract_strided_slice %202 {offsets = [0, 0], sizes = [8, 8], strides = [1, 1]} : vector<8x32xf32> to vector<8x8xf32>
    %cst_137 = arith.constant dense<0.000000e+00> : vector<8x8xf32>
    %239 = tpu.matmul %237, %238, %cst_137 {dimension_numbers = #tpu.dot_dimension_numbers<[1], [0], [0], [1], [0, 0, 1, 1], [], []>} : vector<8x8xf32>, vector<8x8xf32>, vector<8x8xf32> -> vector<8x8xf32>
    %240 = vector.extract_strided_slice %236 {offsets = [8, 0], sizes = [8, 8], strides = [1, 1]} : vector<32x8xf32> to vector<8x8xf32>
    %241 = vector.extract_strided_slice %202 {offsets = [0, 8], sizes = [8, 8], strides = [1, 1]} : vector<8x32xf32> to vector<8x8xf32>
    %cst_138 = arith.constant dense<0.000000e+00> : vector<8x8xf32>
    %242 = tpu.matmul %240, %241, %cst_138 {dimension_numbers = #tpu.dot_dimension_numbers<[1], [0], [0], [1], [0, 0, 1, 1], [], []>} : vector<8x8xf32>, vector<8x8xf32>, vector<8x8xf32> -> vector<8x8xf32>
    %243 = vector.extract_strided_slice %236 {offsets = [16, 0], sizes = [8, 8], strides = [1, 1]} : vector<32x8xf32> to vector<8x8xf32>
    %244 = vector.extract_strided_slice %202 {offsets = [0, 16], sizes = [8, 8], strides = [1, 1]} : vector<8x32xf32> to vector<8x8xf32>
    %cst_139 = arith.constant dense<0.000000e+00> : vector<8x8xf32>
    %245 = tpu.matmul %243, %244, %cst_139 {dimension_numbers = #tpu.dot_dimension_numbers<[1], [0], [0], [1], [0, 0, 1, 1], [], []>} : vector<8x8xf32>, vector<8x8xf32>, vector<8x8xf32> -> vector<8x8xf32>
    %246 = vector.extract_strided_slice %236 {offsets = [24, 0], sizes = [8, 8], strides = [1, 1]} : vector<32x8xf32> to vector<8x8xf32>
    %247 = vector.extract_strided_slice %202 {offsets = [0, 24], sizes = [8, 8], strides = [1, 1]} : vector<8x32xf32> to vector<8x8xf32>
    %cst_140 = arith.constant dense<0.000000e+00> : vector<8x8xf32>
    %248 = tpu.matmul %246, %247, %cst_140 {dimension_numbers = #tpu.dot_dimension_numbers<[1], [0], [0], [1], [0, 0, 1, 1], [], []>} : vector<8x8xf32>, vector<8x8xf32>, vector<8x8xf32> -> vector<8x8xf32>
    %249 = tpu.concatenate %239, %242, %245, %248 in 1 : vector<8x8xf32>, vector<8x8xf32>, vector<8x8xf32>, vector<8x8xf32> -> vector<8x32xf32>
    %c1_141 = arith.constant 1 : index
    %c0_142 = arith.constant 0 : index
    %c0_143 = arith.constant 0 : index
    %250 = vector.load %arg9[%c1_141, %c0_142, %c0_143] : memref<2x32x32xf32, #tpu.memory_space<vmem>>, vector<1x32x32xf32>
    %251 = vector.shape_cast %250 : vector<1x32x32xf32> to vector<32x32xf32>
    %cst_144 = arith.constant dense<0.000000e+00> : vector<8x32xf32>
    %252 = tpu.matmul %249, %251, %cst_144 {dimension_numbers = #tpu.dot_dimension_numbers<[1], [0], [0], [1], [0, 0, 1, 1], [], []>} : vector<8x32xf32>, vector<32x32xf32>, vector<8x32xf32> -> vector<8x32xf32>
    %253 = arith.addf %155, %252 : vector<8x32xf32>
    %c1_145 = arith.constant 1 : index
    %c0_146 = arith.constant 0 : index
    %c0_147 = arith.constant 0 : index
    %254 = vector.load %arg10[%c1_145, %c0_146, %c0_147] : memref<2x1x32xf32, #tpu.memory_space<vmem>>, vector<1x1x32xf32>
    %255 = vector.shape_cast %254 : vector<1x1x32xf32> to vector<1x32xf32>
    %256 = vector.broadcast %255 : vector<1x32xf32> to vector<8x32xf32>
    %257 = arith.addf %253, %256 : vector<8x32xf32>
    %c1_148 = arith.constant 1 : index
    %c0_149 = arith.constant 0 : index
    %c0_150 = arith.constant 0 : index
    %258 = vector.load %arg11[%c1_148, %c0_149, %c0_150] : memref<2x1x32xf32, #tpu.memory_space<vmem>>, vector<1x1x32xf32>
    %259 = vector.shape_cast %258 : vector<1x1x32xf32> to vector<1x32xf32>
    %c1_151 = arith.constant 1 : index
    %c0_152 = arith.constant 0 : index
    %c0_153 = arith.constant 0 : index
    %260 = vector.load %arg12[%c1_151, %c0_152, %c0_153] : memref<2x1x32xf32, #tpu.memory_space<vmem>>, vector<1x1x32xf32>
    %261 = vector.shape_cast %260 : vector<1x1x32xf32> to vector<1x32xf32>
    %cst_154 = arith.constant dense<0.000000e+00> : vector<8xf32>
    %262 = vector.multi_reduction <add>, %257, %cst_154 [1] : vector<8x32xf32> to vector<8xf32>
    %263 = vector.shape_cast %262 : vector<8xf32> to vector<8x1xf32>
    %cst_155 = arith.constant 3.200000e+01 : f32
    %264 = vector.broadcast %cst_155 : f32 to vector<8x1xf32>
    %265 = arith.divf %263, %264 : vector<8x1xf32>
    %266 = vector.broadcast %265 : vector<8x1xf32> to vector<8x32xf32>
    %267 = arith.subf %257, %266 : vector<8x32xf32>
    %268 = arith.mulf %267, %267 : vector<8x32xf32>
    %cst_156 = arith.constant dense<0.000000e+00> : vector<8xf32>
    %269 = vector.multi_reduction <add>, %268, %cst_156 [1] : vector<8x32xf32> to vector<8xf32>
    %270 = vector.shape_cast %269 : vector<8xf32> to vector<8x1xf32>
    %cst_157 = arith.constant 3.200000e+01 : f32
    %271 = vector.broadcast %cst_157 : f32 to vector<8x1xf32>
    %272 = arith.divf %270, %271 : vector<8x1xf32>
    %273 = vector.broadcast %265 : vector<8x1xf32> to vector<8x32xf32>
    %274 = arith.subf %257, %273 : vector<8x32xf32>
    %cst_158 = arith.constant 9.99999974E-6 : f32
    %275 = vector.broadcast %cst_158 : f32 to vector<8x1xf32>
    %276 = arith.addf %272, %275 : vector<8x1xf32>
    %277 = math.rsqrt %276 : vector<8x1xf32>
    %278 = vector.broadcast %277 : vector<8x1xf32> to vector<8x32xf32>
    %279 = arith.mulf %274, %278 : vector<8x32xf32>
    %280 = vector.broadcast %259 : vector<1x32xf32> to vector<8x32xf32>
    %281 = arith.mulf %279, %280 : vector<8x32xf32>
    %282 = vector.broadcast %261 : vector<1x32xf32> to vector<8x32xf32>
    %283 = arith.addf %281, %282 : vector<8x32xf32>
    %c1_159 = arith.constant 1 : index
    %c0_160 = arith.constant 0 : index
    %c0_161 = arith.constant 0 : index
    %284 = vector.load %arg13[%c1_159, %c0_160, %c0_161] : memref<2x32x128xf32, #tpu.memory_space<vmem>>, vector<1x32x128xf32>
    %285 = vector.shape_cast %284 : vector<1x32x128xf32> to vector<32x128xf32>
    %cst_162 = arith.constant dense<0.000000e+00> : vector<8x128xf32>
    %286 = tpu.matmul %283, %285, %cst_162 {dimension_numbers = #tpu.dot_dimension_numbers<[1], [0], [0], [1], [0, 0, 1, 1], [], []>} : vector<8x32xf32>, vector<32x128xf32>, vector<8x128xf32> -> vector<8x128xf32>
    %c1_163 = arith.constant 1 : index
    %c0_164 = arith.constant 0 : index
    %c0_165 = arith.constant 0 : index
    %287 = vector.load %arg14[%c1_163, %c0_164, %c0_165] : memref<2x1x128xf32, #tpu.memory_space<vmem>>, vector<1x1x128xf32>
    %288 = vector.shape_cast %287 : vector<1x1x128xf32> to vector<1x128xf32>
    %289 = vector.broadcast %288 : vector<1x128xf32> to vector<8x128xf32>
    %290 = arith.addf %286, %289 : vector<8x128xf32>
    %cst_166 = arith.constant 1.702000e+00 : f32
    %291 = vector.broadcast %cst_166 : f32 to vector<8x128xf32>
    %292 = arith.mulf %291, %290 : vector<8x128xf32>
    %293 = arith.negf %292 : vector<8x128xf32>
    %294 = math.exp %293 : vector<8x128xf32>
    %cst_167 = arith.constant 1.000000e+00 : f32
    %295 = vector.broadcast %cst_167 : f32 to vector<8x128xf32>
    %296 = arith.addf %295, %294 : vector<8x128xf32>
    %297 = arith.divf %295, %296 : vector<8x128xf32>
    %298 = arith.mulf %290, %297 : vector<8x128xf32>
    %c1_168 = arith.constant 1 : index
    %c0_169 = arith.constant 0 : index
    %c0_170 = arith.constant 0 : index
    %299 = vector.load %arg15[%c1_168, %c0_169, %c0_170] : memref<2x128x32xf32, #tpu.memory_space<vmem>>, vector<1x128x32xf32>
    %300 = vector.shape_cast %299 : vector<1x128x32xf32> to vector<128x32xf32>
    %cst_171 = arith.constant dense<0.000000e+00> : vector<8x32xf32>
    %301 = tpu.matmul %298, %300, %cst_171 {dimension_numbers = #tpu.dot_dimension_numbers<[1], [0], [0], [1], [0, 0, 1, 1], [], []>} : vector<8x128xf32>, vector<128x32xf32>, vector<8x32xf32> -> vector<8x32xf32>
    %302 = arith.addf %257, %301 : vector<8x32xf32>
    %c1_172 = arith.constant 1 : index
    %c0_173 = arith.constant 0 : index
    %c0_174 = arith.constant 0 : index
    %303 = vector.load %arg16[%c1_172, %c0_173, %c0_174] : memref<2x1x32xf32, #tpu.memory_space<vmem>>, vector<1x1x32xf32>
    %304 = vector.shape_cast %303 : vector<1x1x32xf32> to vector<1x32xf32>
    %305 = vector.broadcast %304 : vector<1x32xf32> to vector<8x32xf32>
    %306 = arith.addf %302, %305 : vector<8x32xf32>
    %c0_175 = arith.constant 0 : index
    %c0_176 = arith.constant 0 : index
    %307 = vector.load %arg21[%c0_175, %c0_176] : memref<8x32xf32, #tpu.memory_space<vmem>>, vector<8x32xf32>
    tpu.vector_store %arg21[%c0_175, %c0_176], %306 {strides = array<i32>} : memref<8x32xf32, #tpu.memory_space<vmem>>, vector<8x32xf32>,
    %308 = arith.index_cast %arg0 : i32 to index
    %309 = memref.load %arg1[%308] : memref<2xi32, #tpu.memory_space<smem>>
    %310 = arith.index_cast %309 : i32 to index
    %c0_177 = arith.constant 0 : index
    %311 = vector.load %arg21[%310, %c0_177] : memref<8x32xf32, #tpu.memory_space<vmem>>, vector<1x32xf32>
    %c0_178 = arith.constant 0 : index
    %c0_179 = arith.constant 0 : index
    %312 = vector.load %arg17[%c0_178, %c0_179] : memref<1x32xf32, #tpu.memory_space<vmem>>, vector<1x32xf32>
    %c0_180 = arith.constant 0 : index
    %c0_181 = arith.constant 0 : index
    %313 = vector.load %arg18[%c0_180, %c0_181] : memref<1x32xf32, #tpu.memory_space<vmem>>, vector<1x32xf32>
    %cst_182 = arith.constant dense<0.000000e+00> : vector<1xf32>
    %314 = vector.multi_reduction <add>, %311, %cst_182 [1] : vector<1x32xf32> to vector<1xf32>
    %315 = vector.shape_cast %314 : vector<1xf32> to vector<1x1xf32>
    %cst_183 = arith.constant 3.200000e+01 : f32
    %316 = vector.broadcast %cst_183 : f32 to vector<1x1xf32>
    %317 = arith.divf %315, %316 : vector<1x1xf32>
    %318 = vector.broadcast %317 : vector<1x1xf32> to vector<1x32xf32>
    %319 = arith.subf %311, %318 : vector<1x32xf32>
    %320 = arith.mulf %319, %319 : vector<1x32xf32>
    %cst_184 = arith.constant dense<0.000000e+00> : vector<1xf32>
    %321 = vector.multi_reduction <add>, %320, %cst_184 [1] : vector<1x32xf32> to vector<1xf32>
    %322 = vector.shape_cast %321 : vector<1xf32> to vector<1x1xf32>
    %cst_185 = arith.constant 3.200000e+01 : f32
    %323 = vector.broadcast %cst_185 : f32 to vector<1x1xf32>
    %324 = arith.divf %322, %323 : vector<1x1xf32>
    %325 = vector.broadcast %317 : vector<1x1xf32> to vector<1x32xf32>
    %326 = arith.subf %311, %325 : vector<1x32xf32>
    %cst_186 = arith.constant 9.99999974E-6 : f32
    %327 = vector.broadcast %cst_186 : f32 to vector<1x1xf32>
    %328 = arith.addf %324, %327 : vector<1x1xf32>
    %329 = math.rsqrt %328 : vector<1x1xf32>
    %330 = vector.broadcast %329 : vector<1x1xf32> to vector<1x32xf32>
    %331 = arith.mulf %326, %330 : vector<1x32xf32>
    %332 = arith.mulf %331, %312 : vector<1x32xf32>
    %333 = arith.addf %332, %313 : vector<1x32xf32>
    %c0_187 = arith.constant 0 : index
    %c0_188 = arith.constant 0 : index
    %334 = vector.load %arg19[%c0_187, %c0_188] : memref<32x16xf32, #tpu.memory_space<vmem>>, vector<32x16xf32>
    %cst_189 = arith.constant dense<0.000000e+00> : vector<1x16xf32>
    %335 = tpu.matmul %333, %334, %cst_189 {dimension_numbers = #tpu.dot_dimension_numbers<[1], [0], [0], [1], [0, 0, 1, 1], [], []>} : vector<1x32xf32>, vector<32x16xf32>, vector<1x16xf32> -> vector<1x16xf32>
    %c0_190 = arith.constant 0 : index
    %c0_191 = arith.constant 0 : index
    %c0_192 = arith.constant 0 : index
    %336 = vector.load %arg20[%c0_190, %c0_191, %c0_192] : memref<1x1x16xf32, #tpu.memory_space<vmem>>, vector<1x1x16xf32>
    %337 = vector.shape_cast %336 : vector<1x1x16xf32> to vector<1x16xf32>
    %338 = vector.shape_cast %335 : vector<1x16xf32> to vector<1x1x16xf32>
    tpu.vector_store %arg20[%c0_190, %c0_191, %c0_192], %338 {strides = array<i32>} : memref<1x1x16xf32, #tpu.memory_space<vmem>>, vector<1x1x16xf32>,
    return
  }
  func.func @transform_0(%arg0: i32, %arg1: memref<2xi32, #tpu.memory_space<smem>>) -> (i32, i32, i32) {
    %c0_i32 = arith.constant 0 : i32
    %c0_i32_0 = arith.constant 0 : i32
    %c0_i32_1 = arith.constant 0 : i32
    return %arg0, %c0_i32, %c0_i32_0 : i32, i32, i32
  }
  func.func @transform_1(%arg0: i32, %arg1: memref<2xi32, #tpu.memory_space<smem>>) -> (i32, i32) {
    %c0_i32 = arith.constant 0 : i32
    %c0_i32_0 = arith.constant 0 : i32
    %c0_i32_1 = arith.constant 0 : i32
    return %c0_i32, %c0_i32_0 : i32, i32
  }
  func.func @transform_2(%arg0: i32, %arg1: memref<2xi32, #tpu.memory_space<smem>>) -> (i32, i32) {
    %c0_i32 = arith.constant 0 : i32
    %c0_i32_0 = arith.constant 0 : i32
    %c0_i32_1 = arith.constant 0 : i32
    return %c0_i32, %c0_i32_0 : i32, i32
  }
  func.func @transform_3(%arg0: i32, %arg1: memref<2xi32, #tpu.memory_space<smem>>) -> (i32, i32, i32) {
    %c0_i32 = arith.constant 0 : i32
    %c0_i32_0 = arith.constant 0 : i32
    %c0_i32_1 = arith.constant 0 : i32
    %c0_i32_2 = arith.constant 0 : i32
    return %c0_i32, %c0_i32_0, %c0_i32_1 : i32, i32, i32
  }
  func.func @transform_4(%arg0: i32, %arg1: memref<2xi32, #tpu.memory_space<smem>>) -> (i32, i32, i32) {
    %c0_i32 = arith.constant 0 : i32
    %c0_i32_0 = arith.constant 0 : i32
    %c0_i32_1 = arith.constant 0 : i32
    %c0_i32_2 = arith.constant 0 : i32
    return %c0_i32, %c0_i32_0, %c0_i32_1 : i32, i32, i32
  }
  func.func @transform_5(%arg0: i32, %arg1: memref<2xi32, #tpu.memory_space<smem>>) -> (i32, i32, i32, i32) {
    %c0_i32 = arith.constant 0 : i32
    %c0_i32_0 = arith.constant 0 : i32
    %c0_i32_1 = arith.constant 0 : i32
    %c0_i32_2 = arith.constant 0 : i32
    %c0_i32_3 = arith.constant 0 : i32
    return %c0_i32, %c0_i32_0, %c0_i32_1, %c0_i32_2 : i32, i32, i32, i32
  }
  func.func @transform_6(%arg0: i32, %arg1: memref<2xi32, #tpu.memory_space<smem>>) -> (i32, i32, i32, i32) {
    %c0_i32 = arith.constant 0 : i32
    %c0_i32_0 = arith.constant 0 : i32
    %c0_i32_1 = arith.constant 0 : i32
    %c0_i32_2 = arith.constant 0 : i32
    %c0_i32_3 = arith.constant 0 : i32
    return %c0_i32, %c0_i32_0, %c0_i32_1, %c0_i32_2 : i32, i32, i32, i32
  }
  func.func @transform_7(%arg0: i32, %arg1: memref<2xi32, #tpu.memory_space<smem>>) -> (i32, i32, i32) {
    %c0_i32 = arith.constant 0 : i32
    %c0_i32_0 = arith.constant 0 : i32
    %c0_i32_1 = arith.constant 0 : i32
    %c0_i32_2 = arith.constant 0 : i32
    return %c0_i32, %c0_i32_0, %c0_i32_1 : i32, i32, i32
  }
  func.func @transform_8(%arg0: i32, %arg1: memref<2xi32, #tpu.memory_space<smem>>) -> (i32, i32, i32) {
    %c0_i32 = arith.constant 0 : i32
    %c0_i32_0 = arith.constant 0 : i32
    %c0_i32_1 = arith.constant 0 : i32
    %c0_i32_2 = arith.constant 0 : i32
    return %c0_i32, %c0_i32_0, %c0_i32_1 : i32, i32, i32
  }
  func.func @transform_9(%arg0: i32, %arg1: memref<2xi32, #tpu.memory_space<smem>>) -> (i32, i32, i32) {
    %c0_i32 = arith.constant 0 : i32
    %c0_i32_0 = arith.constant 0 : i32
    %c0_i32_1 = arith.constant 0 : i32
    %c0_i32_2 = arith.constant 0 : i32
    return %c0_i32, %c0_i32_0, %c0_i32_1 : i32, i32, i32
  }
  func.func @transform_10(%arg0: i32, %arg1: memref<2xi32, #tpu.memory_space<smem>>) -> (i32, i32, i32) {
    %c0_i32 = arith.constant 0 : i32
    %c0_i32_0 = arith.constant 0 : i32
    %c0_i32_1 = arith.constant 0 : i32
    %c0_i32_2 = arith.constant 0 : i32
    return %c0_i32, %c0_i32_0, %c0_i32_1 : i32, i32, i32
  }
  func.func @transform_11(%arg0: i32, %arg1: memref<2xi32, #tpu.memory_space<smem>>) -> (i32, i32, i32) {
    %c0_i32 = arith.constant 0 : i32
    %c0_i32_0 = arith.constant 0 : i32
    %c0_i32_1 = arith.constant 0 : i32
    %c0_i32_2 = arith.constant 0 : i32
    return %c0_i32, %c0_i32_0, %c0_i32_1 : i32, i32, i32
  }
  func.func @transform_12(%arg0: i32, %arg1: memref<2xi32, #tpu.memory_space<smem>>) -> (i32, i32, i32) {
    %c0_i32 = arith.constant 0 : i32
    %c0_i32_0 = arith.constant 0 : i32
    %c0_i32_1 = arith.constant 0 : i32
    %c0_i32_2 = arith.constant 0 : i32
    return %c0_i32, %c0_i32_0, %c0_i32_1 : i32, i32, i32
  }
  func.func @transform_13(%arg0: i32, %arg1: memref<2xi32, #tpu.memory_space<smem>>) -> (i32, i32, i32) {
    %c0_i32 = arith.constant 0 : i32
    %c0_i32_0 = arith.constant 0 : i32
    %c0_i32_1 = arith.constant 0 : i32
    %c0_i32_2 = arith.constant 0 : i32
    return %c0_i32, %c0_i32_0, %c0_i32_1 : i32, i32, i32
  }
  func.func @transform_14(%arg0: i32, %arg1: memref<2xi32, #tpu.memory_space<smem>>) -> (i32, i32, i32) {
    %c0_i32 = arith.constant 0 : i32
    %c0_i32_0 = arith.constant 0 : i32
    %c0_i32_1 = arith.constant 0 : i32
    %c0_i32_2 = arith.constant 0 : i32
    return %c0_i32, %c0_i32_0, %c0_i32_1 : i32, i32, i32
  }
  func.func @transform_15(%arg0: i32, %arg1: memref<2xi32, #tpu.memory_space<smem>>) -> (i32, i32) {
    %c0_i32 = arith.constant 0 : i32
    %c0_i32_0 = arith.constant 0 : i32
    %c0_i32_1 = arith.constant 0 : i32
    return %c0_i32, %c0_i32_0 : i32, i32
  }
  func.func @transform_16(%arg0: i32, %arg1: memref<2xi32, #tpu.memory_space<smem>>) -> (i32, i32) {
    %c0_i32 = arith.constant 0 : i32
    %c0_i32_0 = arith.constant 0 : i32
    %c0_i32_1 = arith.constant 0 : i32
    return %c0_i32, %c0_i32_0 : i32, i32
  }
  func.func @transform_17(%arg0: i32, %arg1: memref<2xi32, #tpu.memory_space<smem>>) -> (i32, i32) {
    %c0_i32 = arith.constant 0 : i32
    %c0_i32_0 = arith.constant 0 : i32
    %c0_i32_1 = arith.constant 0 : i32
    return %c0_i32, %c0_i32_0 : i32, i32
  }
  func.func @transform_18(%arg0: i32, %arg1: memref<2xi32, #tpu.memory_space<smem>>) -> (i32, i32, i32) {
    %c0_i32 = arith.constant 0 : i32
    %c0_i32_0 = arith.constant 0 : i32
    %c0_i32_1 = arith.constant 0 : i32
    return %arg0, %c0_i32, %c0_i32_0 : i32, i32, i32
  }
}

</mosaic_0001>

<llo_original>
// kernel: text_encoder.1
$region0: #{text_encoder.1}
  #allocation0 [shape = 'u32[]', space=smem, size = 0x4, offset = 0x4, fixed_abs, tag = 'smem constant byte address 0x4 - core index']
  #allocation1 [shape = 'u32[72,128]{1,0:T(1,128)}', space=vmem, size = 0x9000, scoped, tag = 'internal scratch']
  #allocation2 [shape = 'f32[8,32]{1,0:T(8,128)}', space=vmem, size = 0x1000, scoped, tag = 'scratch operand']
  #allocation3 [shape = 's32[1]{0}', space=sflag, size = 0x4, scoped, tag = 'scoped memory for text_encoder.1']
  #allocation4 [shape = 'u8[512]{0}', space=smem, size = 0x200, scoped, tag = 'prefetched SMEM operand 0']
  %s0 = inlined_call_operand.vmem [shape: s32[2], index: 0, kind: input, shape index: {}]
  %s1 = inlined_call_operand.hbm [shape: f32[2,8,32], index: 1, kind: input, shape index: {}]
  %s2 = inlined_call_operand.hbm [shape: f32[8,32], index: 2, kind: input, shape index: {}]
  %s3 = inlined_call_operand.hbm [shape: f32[8,8], index: 3, kind: input, shape index: {}]
  %s4 = inlined_call_operand.vmem [shape: f32[2,1,32], index: 4, kind: input, shape index: {}]
  %s5 = inlined_call_operand.vmem [shape: f32[2,1,32], index: 5, kind: input, shape index: {}]
  %s6 = inlined_call_operand.vmem [shape: f32[2,3,32,32], index: 6, kind: input, shape index: {}]
  %s7 = inlined_call_operand.hbm [shape: f32[2,3,1,32], index: 7, kind: input, shape index: {}]
  %s8 = inlined_call_operand.vmem [shape: f32[2,32,32], index: 8, kind: input, shape index: {}]
  %s9 = inlined_call_operand.hbm [shape: f32[2,1,32], index: 9, kind: input, shape index: {}]
  %s10 = inlined_call_operand.hbm [shape: f32[2,1,32], index: 10, kind: input, shape index: {}]
  %s11 = inlined_call_operand.hbm [shape: f32[2,1,32], index: 11, kind: input, shape index: {}]
  %s12 = inlined_call_operand.vmem [shape: f32[2,32,128], index: 12, kind: input, shape index: {}]
  %s13 = inlined_call_operand.hbm [shape: f32[2,1,128], index: 13, kind: input, shape index: {}]
  %s14 = inlined_call_operand.vmem [shape: f32[2,128,32], index: 14, kind: input, shape index: {}]
  %s15 = inlined_call_operand.hbm [shape: f32[2,1,32], index: 15, kind: input, shape index: {}]
  %s16 = inlined_call_operand.vmem [shape: f32[1,32], index: 16, kind: input, shape index: {}]
  %s17 = inlined_call_operand.hbm [shape: f32[1,32], index: 17, kind: input, shape index: {}]
  %s18 = inlined_call_operand.vmem [shape: f32[32,16], index: 18, kind: input, shape index: {}]
  %s19 = inlined_call_operand.hbm [shape: f32[2,1,16], index: 19, kind: output, shape index: {}]
  %s20 = sld [smem:[#allocation0]]
  $region145: #{text_encoder.1} parent=0
    _
  %s22 = ssub.s32 1, %s20
  %s23 = scalar_select 0, %s22, %s20
  %s25 = sshll.u32 %s0, 4
  %s26 = int_to_ptr.vmem [resolvable:$true] %s25
  %28 = dma.vmem_to_smem %s26, 16, [#allocation4], [#allocation3]
  %30 = dma.done [#allocation3], 16
  %31 = sfence
  $region1: #{text_encoder.1} parent=0
    #allocation5 [shape = 'u8[8192]{0}', space=vmem, size = 0x2000, scoped, tag = 'input window, operand 1']
    #allocation6 [shape = 's32[2]{0}', space=sflag, size = 0x8, scoped, tag = 'scoped memory for text_encoder.1']
    #allocation7 [shape = 's32[2]{0}', space=sflag, size = 0x8, scoped, tag = 'scoped memory for text_encoder.1']
    #allocation8 [shape = 'u8[4096]{0}', space=vmem, size = 0x1000, scoped, tag = 'input window, operand 2, single buffered']
    #allocation9 [shape = 's32[1]{0}', space=sflag, size = 0x4, scoped, tag = 'scoped memory for text_encoder.1']
    #allocation10 [shape = 'u8[4096]{0}', space=vmem, size = 0x1000, scoped, tag = 'input window, operand 3, single buffered']
    #allocation11 [shape = 'u8[3072]{0}', space=vmem, size = 0xc00, scoped, tag = 'input window, operand 7, single buffered']
    #allocation12 [shape = 's32[1]{0}', space=sflag, size = 0x4, scoped, tag = 'scoped memory for text_encoder.1']
    #allocation13 [shape = 'u8[1024]{0}', space=vmem, size = 0x400, scoped, tag = 'input window, operand 9, single buffered']
    #allocation14 [shape = 'u8[1024]{0}', space=vmem, size = 0x400, scoped, tag = 'input window, operand 10, single buffered']
    #allocation15 [shape = 's32[1]{0}', space=sflag, size = 0x4, scoped, tag = 'scoped memory for text_encoder.1']
    #allocation16 [shape = 'u8[1024]{0}', space=vmem, size = 0x400, scoped, tag = 'input window, operand 11, single buffered']
    #allocation17 [shape = 'u8[1024]{0}', space=vmem, size = 0x400, scoped, tag = 'input window, operand 13, single buffered']
    #allocation18 [shape = 's32[1]{0}', space=sflag, size = 0x4, scoped, tag = 'scoped memory for text_encoder.1']
    #allocation19 [shape = 'u8[1024]{0}', space=vmem, size = 0x400, scoped, tag = 'input window, operand 15, single buffered']
    #allocation20 [shape = 'u8[512]{0}', space=vmem, size = 0x400, scoped, tag = 'input window, operand 17, single buffered']
    #allocation21 [shape = 's32[1]{0}', space=sflag, size = 0x4, scoped, tag = 'scoped memory for text_encoder.1']
    #allocation22 [shape = 'u8[1024]{0}', space=vmem, size = 0x400, scoped, tag = 'output window, operand 0']
    %32 = vsyncpa [#allocation6], 0
    %s33 = scalar_lea.sflag [#allocation6], 1
    %34 = vsyncpa %s33, 0
    %35 = vsyncpa [#allocation9], 0
    %36 = vsyncpa [#allocation12], 0
    %37 = vsyncpa [#allocation15], 0
    %38 = vsyncpa [#allocation18], 0
    %39 = vsyncpa [#allocation21], 0
    %40 = vsyncpa [#allocation7], 0
    %s41 = scalar_lea.sflag [#allocation7], 1
    %42 = vsyncpa %s41, 0
    loop: start=0, step=1, limit=4
    $region2: #{text_encoder.1} parent=1 // loop_pre_header
      _
    $region3: #{text_encoder.1} parent=1 // loop_header
      %s44 = sphi 0, %s48
      %p45 = scmp.ge.s32.totalorder %s44, 4
      %s54 = sphi 0, %s56
      %s57 = sphi 0, %s54
      %s58 = sphi 0, %s57
      %s74 = sphi 0, %s58
      %s78 = sphi 0, %s78
      %s80 = sphi 0, %s78
      %s81 = sphi 0, %s80
      %s95 = sphi 0, %s81
      %s99 = sphi 0, %s99
      %s101 = sphi 0, %s99
      %s102 = sphi 0, %s101
      %s116 = sphi 0, %s102
      %s120 = sphi 0, %s120
      %s122 = sphi 0, %s120
      %s123 = sphi 0, %s122
      %s137 = sphi 0, %s123
      %s141 = sphi 0, %s141
      %s143 = sphi 0, %s141
      %s144 = sphi 0, %s143
      %s158 = sphi 0, %s144
      %s162 = sphi 0, %s162
      %s164 = sphi 0, %s162
      %s165 = sphi 0, %s164
      %s179 = sphi 0, %s165
      %s183 = sphi 0, %s183
      %s185 = sphi 0, %s183
      %s186 = sphi 0, %s185
      %s200 = sphi 0, %s186
      %s204 = sphi 0, %s204
      %s206 = sphi 0, %s204
      %s207 = sphi 0, %s206
      %s221 = sphi 0, %s207
      %s225 = sphi 0, %s225
      %s227 = sphi 0, %s225
      %s228 = sphi 0, %s227
      %s242 = sphi 0, %s228
      %s246 = sphi 0, %s246
      %s248 = sphi 0, %s246
      %s249 = sphi 0, %s248
      %s263 = sphi 0, %s249
      %s267 = sphi 0, %s267
      %s269 = sphi 0, %s267
      %s270 = sphi 0, %s269
      %s284 = sphi 0, %s270
      %s288 = sphi 0, %s288
      %s290 = sphi 0, %s288
      %s291 = sphi 0, %s290
      %s305 = sphi 0, %s291
      %s309 = sphi 0, %s309
      %s311 = sphi 0, %s309
      %s312 = sphi 0, %s311
      %s326 = sphi 0, %s312
      %s330 = sphi 0, %s330
      %s332 = sphi 0, %s330
      %s333 = sphi 0, %s332
      %s347 = sphi 0, %s333
      %s351 = sphi 0, %s351
      %s353 = sphi 0, %s351
      %s354 = sphi 0, %s353
      %s368 = sphi 0, %s354
      %s372 = sphi 0, %s372
      %s374 = sphi 0, %s372
      %s375 = sphi 0, %s374
      %s389 = sphi 0, %s375
      %s393 = sphi 0, %s393
      %s395 = sphi 0, %s393
      %s396 = sphi 0, %s395
      %s410 = sphi 0, %s396
      %s414 = sphi 0, %s414
      %s416 = sphi 0, %s414
      %s417 = sphi 0, %s416
      %s431 = sphi 0, %s417
      %s437 = sphi 0, %s439
      %s440 = sphi 0, %s437
      %s441 = sphi 0, %s440
      %s457 = sphi 0, %s441
    $region4: #{text_encoder.1} parent=1 // loop_header_branch
      %47 = sbr.rel (%p45) target = $region8
    $region5: #{text_encoder.1} parent=1 // loop_body
      %s49 = ssub.s32 %s44, 1
      %s50 = ssub.s32 %s44, 2
      %s51 = sadd.s32 %s44, 1
      %s52 = ssub.s32 %s44, %s51
      %p53 = scmp.eq.s32.totalorder %s52, 0
      %s55 = sadd.s32 %s54, 1
      %s56 = scalar_select %p53, %s54, %s55
      %p59 = pneg %p53
      %p60 = scmp.eq.s32.totalorder %s44, 1
      %p61 = por %p59, %p60
      %p62 = scmp.ne.s32.totalorder %s54, %s57
      %p63 = scmp.eq.s32.totalorder %s44, 0
      %p64 = por %p62, %p63
      %p65 = scmp.ne.s32.totalorder %s54, %s57
      %p66 = scmp.eq.s32.totalorder %s49, 1
      %p67 = por %p65, %p66
      %p68 = scmp.ne.s32.totalorder %s57, %s58
      %p69 = scmp.eq.s32.totalorder %s49, 0
      %p70 = por %p68, %p69
      %p71 = scmp.ne.s32.totalorder %s57, %s58
      %p72 = scmp.eq.s32.totalorder %s50, 1
      %p73 = por %p71, %p72
      %p75 = scmp.ne.s32.totalorder %s58, %s74
      %p76 = scmp.eq.s32.totalorder %s50, 0
      %p77 = por %p75, %p76
      %s79 = sadd.s32 %s78, 1
      %p82 = scmp.eq.s32.totalorder %s44, 1
      %p83 = scmp.ne.s32.totalorder %s78, %s80
      %p84 = scmp.eq.s32.totalorder %s44, 0
      %p85 = por %p83, %p84
      %p86 = scmp.ne.s32.totalorder %s78, %s80
      %p87 = scmp.eq.s32.totalorder %s49, 1
      %p88 = por %p86, %p87
      %p89 = scmp.ne.s32.totalorder %s80, %s81
      %p90 = scmp.eq.s32.totalorder %s49, 0
      %p91 = por %p89, %p90
      %p92 = scmp.ne.s32.totalorder %s80, %s81
      %p93 = scmp.eq.s32.totalorder %s50, 1
      %p94 = por %p92, %p93
      %p96 = scmp.ne.s32.totalorder %s81, %s95
      %p97 = scmp.eq.s32.totalorder %s50, 0
      %p98 = por %p96, %p97
      %s100 = sadd.s32 %s99, 1
      %p103 = scmp.eq.s32.totalorder %s44, 1
      %p104 = scmp.ne.s32.totalorder %s99, %s101
      %p105 = scmp.eq.s32.totalorder %s44, 0
      %p106 = por %p104, %p105
      %p107 = scmp.ne.s32.totalorder %s99, %s101
      %p108 = scmp.eq.s32.totalorder %s49, 1
      %p109 = por %p107, %p108
      %p110 = scmp.ne.s32.totalorder %s101, %s102
      %p111 = scmp.eq.s32.totalorder %s49, 0
      %p112 = por %p110, %p111
      %p113 = scmp.ne.s32.totalorder %s101, %s102
      %p114 = scmp.eq.s32.totalorder %s50, 1
      %p115 = por %p113, %p114
      %p117 = scmp.ne.s32.totalorder %s102, %s116
      %p118 = scmp.eq.s32.totalorder %s50, 0
      %p119 = por %p117, %p118
      %s121 = sadd.s32 %s120, 1
      %p124 = scmp.eq.s32.totalorder %s44, 1
      %p125 = scmp.ne.s32.totalorder %s120, %s122
      %p126 = scmp.eq.s32.totalorder %s44, 0
      %p127 = por %p125, %p126
      %p128 = scmp.ne.s32.totalorder %s120, %s122
      %p129 = scmp.eq.s32.totalorder %s49, 1
      %p130 = por %p128, %p129
      %p131 = scmp.ne.s32.totalorder %s122, %s123
      %p132 = scmp.eq.s32.totalorder %s49, 0
      %p133 = por %p131, %p132
      %p134 = scmp.ne.s32.totalorder %s122, %s123
      %p135 = scmp.eq.s32.totalorder %s50, 1
      %p136 = por %p134, %p135
      %p138 = scmp.ne.s32.totalorder %s123, %s137
      %p139 = scmp.eq.s32.totalorder %s50, 0
      %p140 = por %p138, %p139
      %s142 = sadd.s32 %s141, 1
      %p145 = scmp.eq.s32.totalorder %s44, 1
      %p146 = scmp.ne.s32.totalorder %s141, %s143
      %p147 = scmp.eq.s32.totalorder %s44, 0
      %p148 = por %p146, %p147
      %p149 = scmp.ne.s32.totalorder %s141, %s143
      %p150 = scmp.eq.s32.totalorder %s49, 1
      %p151 = por %p149, %p150
      %p152 = scmp.ne.s32.totalorder %s143, %s144
      %p153 = scmp.eq.s32.totalorder %s49, 0
      %p154 = por %p152, %p153
      %p155 = scmp.ne.s32.totalorder %s143, %s144
      %p156 = scmp.eq.s32.totalorder %s50, 1
      %p157 = por %p155, %p156
      %p159 = scmp.ne.s32.totalorder %s144, %s158
      %p160 = scmp.eq.s32.totalorder %s50, 0
      %p161 = por %p159, %p160
      %s163 = sadd.s32 %s162, 1
      %p166 = scmp.eq.s32.totalorder %s44, 1
      %p167 = scmp.ne.s32.totalorder %s162, %s164
      %p168 = scmp.eq.s32.totalorder %s44, 0
      %p169 = por %p167, %p168
      %p170 = scmp.ne.s32.totalorder %s162, %s164
      %p171 = scmp.eq.s32.totalorder %s49, 1
      %p172 = por %p170, %p171
      %p173 = scmp.ne.s32.totalorder %s164, %s165
      %p174 = scmp.eq.s32.totalorder %s49, 0
      %p175 = por %p173, %p174
      %p176 = scmp.ne.s32.totalorder %s164, %s165
      %p177 = scmp.eq.s32.totalorder %s50, 1
      %p178 = por %p176, %p177
      %p180 = scmp.ne.s32.totalorder %s165, %s179
      %p181 = scmp.eq.s32.totalorder %s50, 0
      %p182 = por %p180, %p181
      %s184 = sadd.s32 %s183, 1
      %p187 = scmp.eq.s32.totalorder %s44, 1
      %p188 = scmp.ne.s32.totalorder %s183, %s185
      %p189 = scmp.eq.s32.totalorder %s44, 0
      %p190 = por %p188, %p189
      %p191 = scmp.ne.s32.totalorder %s183, %s185
      %p192 = scmp.eq.s32.totalorder %s49, 1
      %p193 = por %p191, %p192
      %p194 = scmp.ne.s32.totalorder %s185, %s186
      %p195 = scmp.eq.s32.totalorder %s49, 0
      %p196 = por %p194, %p195
      %p197 = scmp.ne.s32.totalorder %s185, %s186
      %p198 = scmp.eq.s32.totalorder %s50, 1
      %p199 = por %p197, %p198
      %p201 = scmp.ne.s32.totalorder %s186, %s200
      %p202 = scmp.eq.s32.totalorder %s50, 0
      %p203 = por %p201, %p202
      %s205 = sadd.s32 %s204, 1
      %p208 = scmp.eq.s32.totalorder %s44, 1
      %p209 = scmp.ne.s32.totalorder %s204, %s206
      %p210 = scmp.eq.s32.totalorder %s44, 0
      %p211 = por %p209, %p210
      %p212 = scmp.ne.s32.totalorder %s204, %s206
      %p213 = scmp.eq.s32.totalorder %s49, 1
      %p214 = por %p212, %p213
      %p215 = scmp.ne.s32.totalorder %s206, %s207
      %p216 = scmp.eq.s32.totalorder %s49, 0
      %p217 = por %p215, %p216
      %p218 = scmp.ne.s32.totalorder %s206, %s207
      %p219 = scmp.eq.s32.totalorder %s50, 1
      %p220 = por %p218, %p219
      %p222 = scmp.ne.s32.totalorder %s207, %s221
      %p223 = scmp.eq.s32.totalorder %s50, 0
      %p224 = por %p222, %p223
      %s226 = sadd.s32 %s225, 1
      %p229 = scmp.eq.s32.totalorder %s44, 1
      %p230 = scmp.ne.s32.totalorder %s225, %s227
      %p231 = scmp.eq.s32.totalorder %s44, 0
      %p232 = por %p230, %p231
      %p233 = scmp.ne.s32.totalorder %s225, %s227
      %p234 = scmp.eq.s32.totalorder %s49, 1
      %p235 = por %p233, %p234
      %p236 = scmp.ne.s32.totalorder %s227, %s228
      %p237 = scmp.eq.s32.totalorder %s49, 0
      %p238 = por %p236, %p237
      %p239 = scmp.ne.s32.totalorder %s227, %s228
      %p240 = scmp.eq.s32.totalorder %s50, 1
      %p241 = por %p239, %p240
      %p243 = scmp.ne.s32.totalorder %s228, %s242
      %p244 = scmp.eq.s32.totalorder %s50, 0
      %p245 = por %p243, %p244
      %s247 = sadd.s32 %s246, 1
      %p250 = scmp.eq.s32.totalorder %s44, 1
      %p251 = scmp.ne.s32.totalorder %s246, %s248
      %p252 = scmp.eq.s32.totalorder %s44, 0
      %p253 = por %p251, %p252
      %p254 = scmp.ne.s32.totalorder %s246, %s248
      %p255 = scmp.eq.s32.totalorder %s49, 1
      %p256 = por %p254, %p255
      %p257 = scmp.ne.s32.totalorder %s248, %s249
      %p258 = scmp.eq.s32.totalorder %s49, 0
      %p259 = por %p257, %p258
      %p260 = scmp.ne.s32.totalorder %s248, %s249
      %p261 = scmp.eq.s32.totalorder %s50, 1
      %p262 = por %p260, %p261
      %p264 = scmp.ne.s32.totalorder %s249, %s263
      %p265 = scmp.eq.s32.totalorder %s50, 0
      %p266 = por %p264, %p265
      %s268 = sadd.s32 %s267, 1
      %p271 = scmp.eq.s32.totalorder %s44, 1
      %p272 = scmp.ne.s32.totalorder %s267, %s269
      %p273 = scmp.eq.s32.totalorder %s44, 0
      %p274 = por %p272, %p273
      %p275 = scmp.ne.s32.totalorder %s267, %s269
      %p276 = scmp.eq.s32.totalorder %s49, 1
      %p277 = por %p275, %p276
      %p278 = scmp.ne.s32.totalorder %s269, %s270
      %p279 = scmp.eq.s32.totalorder %s49, 0
      %p280 = por %p278, %p279
      %p281 = scmp.ne.s32.totalorder %s269, %s270
      %p282 = scmp.eq.s32.totalorder %s50, 1
      %p283 = por %p281, %p282
      %p285 = scmp.ne.s32.totalorder %s270, %s284
      %p286 = scmp.eq.s32.totalorder %s50, 0
      %p287 = por %p285, %p286
      %s289 = sadd.s32 %s288, 1
      %p292 = scmp.eq.s32.totalorder %s44, 1
      %p293 = scmp.ne.s32.totalorder %s288, %s290
      %p294 = scmp.eq.s32.totalorder %s44, 0
      %p295 = por %p293, %p294
      %p296 = scmp.ne.s32.totalorder %s288, %s290
      %p297 = scmp.eq.s32.totalorder %s49, 1
      %p298 = por %p296, %p297
      %p299 = scmp.ne.s32.totalorder %s290, %s291
      %p300 = scmp.eq.s32.totalorder %s49, 0
      %p301 = por %p299, %p300
      %p302 = scmp.ne.s32.totalorder %s290, %s291
      %p303 = scmp.eq.s32.totalorder %s50, 1
      %p304 = por %p302, %p303
      %p306 = scmp.ne.s32.totalorder %s291, %s305
      %p307 = scmp.eq.s32.totalorder %s50, 0
      %p308 = por %p306, %p307
      %s310 = sadd.s32 %s309, 1
      %p313 = scmp.eq.s32.totalorder %s44, 1
      %p314 = scmp.ne.s32.totalorder %s309, %s311
      %p315 = scmp.eq.s32.totalorder %s44, 0
      %p316 = por %p314, %p315
      %p317 = scmp.ne.s32.totalorder %s309, %s311
      %p318 = scmp.eq.s32.totalorder %s49, 1
      %p319 = por %p317, %p318
      %p320 = scmp.ne.s32.totalorder %s311, %s312
      %p321 = scmp.eq.s32.totalorder %s49, 0
      %p322 = por %p320, %p321
      %p323 = scmp.ne.s32.totalorder %s311, %s312
      %p324 = scmp.eq.s32.totalorder %s50, 1
      %p325 = por %p323, %p324
      %p327 = scmp.ne.s32.totalorder %s312, %s326
      %p328 = scmp.eq.s32.totalorder %s50, 0
      %p329 = por %p327, %p328
      %s331 = sadd.s32 %s330, 1
      %p334 = scmp.eq.s32.totalorder %s44, 1
      %p335 = scmp.ne.s32.totalorder %s330, %s332
      %p336 = scmp.eq.s32.totalorder %s44, 0
      %p337 = por %p335, %p336
      %p338 = scmp.ne.s32.totalorder %s330, %s332
      %p339 = scmp.eq.s32.totalorder %s49, 1
      %p340 = por %p338, %p339
      %p341 = scmp.ne.s32.totalorder %s332, %s333
      %p342 = scmp.eq.s32.totalorder %s49, 0
      %p343 = por %p341, %p342
      %p344 = scmp.ne.s32.totalorder %s332, %s333
      %p345 = scmp.eq.s32.totalorder %s50, 1
      %p346 = por %p344, %p345
      %p348 = scmp.ne.s32.totalorder %s333, %s347
      %p349 = scmp.eq.s32.totalorder %s50, 0
      %p350 = por %p348, %p349
      %s352 = sadd.s32 %s351, 1
      %p355 = scmp.eq.s32.totalorder %s44, 1
      %p356 = scmp.ne.s32.totalorder %s351, %s353
      %p357 = scmp.eq.s32.totalorder %s44, 0
      %p358 = por %p356, %p357
      %p359 = scmp.ne.s32.totalorder %s351, %s353
      %p360 = scmp.eq.s32.totalorder %s49, 1
      %p361 = por %p359, %p360
      %p362 = scmp.ne.s32.totalorder %s353, %s354
      %p363 = scmp.eq.s32.totalorder %s49, 0
      %p364 = por %p362, %p363
      %p365 = scmp.ne.s32.totalorder %s353, %s354
      %p366 = scmp.eq.s32.totalorder %s50, 1
      %p367 = por %p365, %p366
      %p369 = scmp.ne.s32.totalorder %s354, %s368
      %p370 = scmp.eq.s32.totalorder %s50, 0
      %p371 = por %p369, %p370
      %s373 = sadd.s32 %s372, 1
      %p376 = scmp.eq.s32.totalorder %s44, 1
      %p377 = scmp.ne.s32.totalorder %s372, %s374
      %p378 = scmp.eq.s32.totalorder %s44, 0
      %p379 = por %p377, %p378
      %p380 = scmp.ne.s32.totalorder %s372, %s374
      %p381 = scmp.eq.s32.totalorder %s49, 1
      %p382 = por %p380, %p381
      %p383 = scmp.ne.s32.totalorder %s374, %s375
      %p384 = scmp.eq.s32.totalorder %s49, 0
      %p385 = por %p383, %p384
      %p386 = scmp.ne.s32.totalorder %s374, %s375
      %p387 = scmp.eq.s32.totalorder %s50, 1
      %p388 = por %p386, %p387
      %p390 = scmp.ne.s32.totalorder %s375, %s389
      %p391 = scmp.eq.s32.totalorder %s50, 0
      %p392 = por %p390, %p391
      %s394 = sadd.s32 %s393, 1
      %p397 = scmp.eq.s32.totalorder %s44, 1
      %p398 = scmp.ne.s32.totalorder %s393, %s395
      %p399 = scmp.eq.s32.totalorder %s44, 0
      %p400 = por %p398, %p399
      %p401 = scmp.ne.s32.totalorder %s393, %s395
      %p402 = scmp.eq.s32.totalorder %s49, 1
      %p403 = por %p401, %p402
      %p404 = scmp.ne.s32.totalorder %s395, %s396
      %p405 = scmp.eq.s32.totalorder %s49, 0
      %p406 = por %p404, %p405
      %p407 = scmp.ne.s32.totalorder %s395, %s396
      %p408 = scmp.eq.s32.totalorder %s50, 1
      %p409 = por %p407, %p408
      %p411 = scmp.ne.s32.totalorder %s396, %s410
      %p412 = scmp.eq.s32.totalorder %s50, 0
      %p413 = por %p411, %p412
      %s415 = sadd.s32 %s414, 1
      %p418 = scmp.eq.s32.totalorder %s44, 1
      %p419 = scmp.ne.s32.totalorder %s414, %s416
      %p420 = scmp.eq.s32.totalorder %s44, 0
      %p421 = por %p419, %p420
      %p422 = scmp.ne.s32.totalorder %s414, %s416
      %p423 = scmp.eq.s32.totalorder %s49, 1
      %p424 = por %p422, %p423
      %p425 = scmp.ne.s32.totalorder %s416, %s417
      %p426 = scmp.eq.s32.totalorder %s49, 0
      %p427 = por %p425, %p426
      %p428 = scmp.ne.s32.totalorder %s416, %s417
      %p429 = scmp.eq.s32.totalorder %s50, 1
      %p430 = por %p428, %p429
      %p432 = scmp.ne.s32.totalorder %s417, %s431
      %p433 = scmp.eq.s32.totalorder %s50, 0
      %p434 = por %p432, %p433
      %s435 = ssub.s32 %s44, %s51
      %p436 = scmp.eq.s32.totalorder %s435, 0
      %s438 = sadd.s32 %s437, 1
      %s439 = scalar_select %p436, %s437, %s438
      %p442 = pneg %p436
      %p443 = scmp.eq.s32.totalorder %s44, 1
      %p444 = por %p442, %p443
      %p445 = scmp.ne.s32.totalorder %s437, %s440
      %p446 = scmp.eq.s32.totalorder %s44, 0
      %p447 = por %p445, %p446
      %p448 = scmp.ne.s32.totalorder %s437, %s440
      %p449 = scmp.eq.s32.totalorder %s49, 1
      %p450 = por %p448, %p449
      %p451 = scmp.ne.s32.totalorder %s440, %s441
      %p452 = scmp.eq.s32.totalorder %s49, 0
      %p453 = por %p451, %p452
      %p454 = scmp.ne.s32.totalorder %s440, %s441
      %p455 = scmp.eq.s32.totalorder %s50, 1
      %p456 = por %p454, %p455
      %p458 = scmp.ne.s32.totalorder %s441, %s457
      %p459 = scmp.eq.s32.totalorder %s50, 0
      %p460 = por %p458, %p459
      %p461 = scmp.le.s32.totalorder 1, %s44
      %p462 = scmp.lt.s32.totalorder %s44, 3
      %p463 = pnand %p461, %p462
      %p464 = pneg %p463
      // Predicated region
      $region9: #{text_encoder.1} parent=5 // pred_check
        _
      $region10: #{text_encoder.1} parent=5 // pred_check_branch
        %466 = sbr.rel (%p463) target = $region12
      $region11: #{text_encoder.1} parent=5 // pred_region
        %s467 = ssub.s32 %s44, 1
        // Predicated region
        $region13: #{text_encoder.1} parent=11 // pred_check
          %p468 = pneg %p91
        $region14: #{text_encoder.1} parent=11 // pred_check_branch
          %470 = sbr.rel (%p468) target = $region16
        $region15: #{text_encoder.1} parent=11 // pred_region
          %472 = vsyncadd [#allocation9], 0
          %s474 = sshll.u32 %s2, 4
          %s475 = int_to_ptr.hbm [resolvable:$true] %s474
          %s476 = sshll.u32 [#allocation8], 4
          %s477 = int_to_ptr.vmem [resolvable:$true] %s476
          %479 = dma.hbm_to_vmem [thread:$0]  %s475, 128, %s477, [#allocation9]
        $region16: #{text_encoder.1} parent=11 // pred_fallthru
          _
        // Predicated region
        $region17: #{text_encoder.1} parent=11 // pred_check
          %p480 = pneg %p112
        $region18: #{text_encoder.1} parent=11 // pred_check_branch
          %482 = sbr.rel (%p480) target = $region20
        $region19: #{text_encoder.1} parent=11 // pred_region
          %484 = vsyncadd [#allocation9], 0
          %s486 = sshll.u32 %s3, 4
          %s487 = int_to_ptr.hbm [resolvable:$true] %s486
          %s488 = sshll.u32 [#allocation10], 4
          %s489 = int_to_ptr.vmem [resolvable:$true] %s488
          %491 = dma.hbm_to_vmem [thread:$0]  %s487, 128, %s489, [#allocation9]
        $region20: #{text_encoder.1} parent=11 // pred_fallthru
          _
        // Predicated region
        $region21: #{text_encoder.1} parent=11 // pred_check
          %p492 = pneg %p133
        $region22: #{text_encoder.1} parent=11 // pred_check_branch
          %494 = sbr.rel (%p492) target = $region24
        $region23: #{text_encoder.1} parent=11 // pred_region
          _
        $region24: #{text_encoder.1} parent=11 // pred_fallthru
          _
        // Predicated region
        $region25: #{text_encoder.1} parent=11 // pred_check
          %p495 = pneg %p154
        $region26: #{text_encoder.1} parent=11 // pred_check_branch
          %497 = sbr.rel (%p495) target = $region28
        $region27: #{text_encoder.1} parent=11 // pred_region
          _
        $region28: #{text_encoder.1} parent=11 // pred_fallthru
          _
        // Predicated region
        $region29: #{text_encoder.1} parent=11 // pred_check
          %p498 = pneg %p175
        $region30: #{text_encoder.1} parent=11 // pred_check_branch
          %500 = sbr.rel (%p498) target = $region32
        $region31: #{text_encoder.1} parent=11 // pred_region
          _
        $region32: #{text_encoder.1} parent=11 // pred_fallthru
          _
        // Predicated region
        $region33: #{text_encoder.1} parent=11 // pred_check
          %p501 = pneg %p196
        $region34: #{text_encoder.1} parent=11 // pred_check_branch
          %503 = sbr.rel (%p501) target = $region36
        $region35: #{text_encoder.1} parent=11 // pred_region
          %505 = vsyncadd [#allocation12], 0
          %s506 = sshll.u32 %s7, 4
          %s507 = int_to_ptr.hbm [resolvable:$true] %s506
          %s508 = sshll.u32 [#allocation11], 4
          %s509 = int_to_ptr.vmem [resolvable:$true] %s508
          %514 = dma.hbm_to_vmem [thread:$0]  %s507, 96, %s509, [#allocation12], 16, 16, 1
        $region36: #{text_encoder.1} parent=11 // pred_fallthru
          _
        // Predicated region
        $region37: #{text_encoder.1} parent=11 // pred_check
          %p515 = pneg %p217
        $region38: #{text_encoder.1} parent=11 // pred_check_branch
          %517 = sbr.rel (%p515) target = $region40
        $region39: #{text_encoder.1} parent=11 // pred_region
          _
        $region40: #{text_encoder.1} parent=11 // pred_fallthru
          _
        // Predicated region
        $region41: #{text_encoder.1} parent=11 // pred_check
          %p518 = pneg %p238
        $region42: #{text_encoder.1} parent=11 // pred_check_branch
          %520 = sbr.rel (%p518) target = $region44
        $region43: #{text_encoder.1} parent=11 // pred_region
          %522 = vsyncadd [#allocation12], 0
          %s523 = sshll.u32 %s9, 4
          %s524 = int_to_ptr.hbm [resolvable:$true] %s523
          %s525 = sshll.u32 [#allocation13], 4
          %s526 = int_to_ptr.vmem [resolvable:$true] %s525
          %531 = dma.hbm_to_vmem [thread:$0]  %s524, 32, %s526, [#allocation12], 16, 16, 1
        $region44: #{text_encoder.1} parent=11 // pred_fallthru
          _
        // Predicated region
        $region45: #{text_encoder.1} parent=11 // pred_check
          %p532 = pneg %p259
        $region46: #{text_encoder.1} parent=11 // pred_check_branch
          %534 = sbr.rel (%p532) target = $region48
        $region47: #{text_encoder.1} parent=11 // pred_region
          %536 = vsyncadd [#allocation15], 0
          %s537 = sshll.u32 %s10, 4
          %s538 = int_to_ptr.hbm [resolvable:$true] %s537
          %s539 = sshll.u32 [#allocation14], 4
          %s540 = int_to_ptr.vmem [resolvable:$true] %s539
          %545 = dma.hbm_to_vmem [thread:$0]  %s538, 32, %s540, [#allocation15], 16, 16, 1
        $region48: #{text_encoder.1} parent=11 // pred_fallthru
          _
        // Predicated region
        $region49: #{text_encoder.1} parent=11 // pred_check
          %p546 = pneg %p280
        $region50: #{text_encoder.1} parent=11 // pred_check_branch
          %548 = sbr.rel (%p546) target = $region52
        $region51: #{text_encoder.1} parent=11 // pred_region
          %550 = vsyncadd [#allocation15], 0
          %s551 = sshll.u32 %s11, 4
          %s552 = int_to_ptr.hbm [resolvable:$true] %s551
          %s553 = sshll.u32 [#allocation16], 4
          %s554 = int_to_ptr.vmem [resolvable:$true] %s553
          %559 = dma.hbm_to_vmem [thread:$0]  %s552, 32, %s554, [#allocation15], 16, 16, 1
        $region52: #{text_encoder.1} parent=11 // pred_fallthru
          _
        // Predicated region
        $region53: #{text_encoder.1} parent=11 // pred_check
          %p560 = pneg %p301
        $region54: #{text_encoder.1} parent=11 // pred_check_branch
          %562 = sbr.rel (%p560) target = $region56
        $region55: #{text_encoder.1} parent=11 // pred_region
          _
        $region56: #{text_encoder.1} parent=11 // pred_fallthru
          _
        // Predicated region
        $region57: #{text_encoder.1} parent=11 // pred_check
          %p563 = pneg %p322
        $region58: #{text_encoder.1} parent=11 // pred_check_branch
          %565 = sbr.rel (%p563) target = $region60
        $region59: #{text_encoder.1} parent=11 // pred_region
          %567 = vsyncadd [#allocation18], 0
          %s568 = sshll.u32 %s13, 4
          %s569 = int_to_ptr.hbm [resolvable:$true] %s568
          %s570 = sshll.u32 [#allocation17], 4
          %s571 = int_to_ptr.vmem [resolvable:$true] %s570
          %576 = dma.hbm_to_vmem [thread:$0]  %s569, 32, %s571, [#allocation18], 16, 16, 1
        $region60: #{text_encoder.1} parent=11 // pred_fallthru
          _
        // Predicated region
        $region61: #{text_encoder.1} parent=11 // pred_check
          %p577 = pneg %p343
        $region62: #{text_encoder.1} parent=11 // pred_check_branch
          %579 = sbr.rel (%p577) target = $region64
        $region63: #{text_encoder.1} parent=11 // pred_region
          _
        $region64: #{text_encoder.1} parent=11 // pred_fallthru
          _
        // Predicated region
        $region65: #{text_encoder.1} parent=11 // pred_check
          %p580 = pneg %p364
        $region66: #{text_encoder.1} parent=11 // pred_check_branch
          %582 = sbr.rel (%p580) target = $region68
        $region67: #{text_encoder.1} parent=11 // pred_region
          %584 = vsyncadd [#allocation18], 0
          %s585 = sshll.u32 %s15, 4
          %s586 = int_to_ptr.hbm [resolvable:$true] %s585
          %s587 = sshll.u32 [#allocation19], 4
          %s588 = int_to_ptr.vmem [resolvable:$true] %s587
          %593 = dma.hbm_to_vmem [thread:$0]  %s586, 32, %s588, [#allocation18], 16, 16, 1
        $region68: #{text_encoder.1} parent=11 // pred_fallthru
          _
        // Predicated region
        $region69: #{text_encoder.1} parent=11 // pred_check
          %p594 = pneg %p385
        $region70: #{text_encoder.1} parent=11 // pred_check_branch
          %596 = sbr.rel (%p594) target = $region72
        $region71: #{text_encoder.1} parent=11 // pred_region
          _
        $region72: #{text_encoder.1} parent=11 // pred_fallthru
          _
        // Predicated region
        $region73: #{text_encoder.1} parent=11 // pred_check
          %p597 = pneg %p406
        $region74: #{text_encoder.1} parent=11 // pred_check_branch
          %599 = sbr.rel (%p597) target = $region76
        $region75: #{text_encoder.1} parent=11 // pred_region
          %601 = vsyncadd [#allocation21], 0
          %s603 = sshll.u32 %s17, 4
          %s604 = int_to_ptr.hbm [resolvable:$true] %s603
          %s605 = sshll.u32 [#allocation20], 4
          %s606 = int_to_ptr.vmem [resolvable:$true] %s605
          %608 = dma.hbm_to_vmem [thread:$0]  %s604, 16, %s606, [#allocation21]
        $region76: #{text_encoder.1} parent=11 // pred_fallthru
          _
        // Predicated region
        $region77: #{text_encoder.1} parent=11 // pred_check
          %p609 = pneg %p427
        $region78: #{text_encoder.1} parent=11 // pred_check_branch
          %611 = sbr.rel (%p609) target = $region80
        $region79: #{text_encoder.1} parent=11 // pred_region
          _
        $region80: #{text_encoder.1} parent=11 // pred_fallthru
          _
      $region12: #{text_encoder.1} parent=5 // pred_fallthru
        _
      %p612 = scmp.lt.s32.totalorder %s44, 2
      // Predicated region
      $region81: #{text_encoder.1} parent=5 // pred_check
        %p613 = pneg %p612
      $region82: #{text_encoder.1} parent=5 // pred_check_branch
        %615 = sbr.rel (%p613) target = $region84
      $region83: #{text_encoder.1} parent=5 // pred_region
        // Predicated region
        $region85: #{text_encoder.1} parent=83 // pred_check
          %p616 = pneg %p64
        $region86: #{text_encoder.1} parent=83 // pred_check_branch
          %618 = sbr.rel (%p616) target = $region88
        $region87: #{text_encoder.1} parent=83 // pred_region
          %s619 = sand.u32 %s54, 1
          %s620 = scalar_lea.sflag [#allocation6], %s619
          %s621 = sand.u32 %s54, 1
          %s622 = smul.addr %s621, 8
          %s623 = scalar_lea.vmem [#allocation5], %s622
          %625 = vsyncadd %s620, 0
          %s626 = smul.addr %s44, 8
          %s627 = scalar_lea.hbm %s1, %s626
          %s629 = sshll.u32 %s627, 4
          %s630 = int_to_ptr.hbm [resolvable:$true] %s629
          %s631 = sshll.u32 %s623, 4
          %s632 = int_to_ptr.vmem [resolvable:$true] %s631
          %634 = dma.hbm_to_vmem [thread:$0]  %s630, 128, %s632, %s620
        $region88: #{text_encoder.1} parent=83 // pred_fallthru
          _
      $region84: #{text_encoder.1} parent=5 // pred_fallthru
        _
      %p635 = scmp.le.s32.totalorder 1, %s44
      %p636 = scmp.lt.s32.totalorder %s44, 3
      %p637 = pnand %p635, %p636
      %p638 = pneg %p637
      // Predicated region
      $region89: #{text_encoder.1} parent=5 // pred_check
        _
      $region90: #{text_encoder.1} parent=5 // pred_check_branch
        %640 = sbr.rel (%p637) target = $region92
      $region91: #{text_encoder.1} parent=5 // pred_region
        %s641 = ssub.s32 %s44, 1
        %s642 = sand.u32 %s57, 1
        %s643 = scalar_lea.sflag [#allocation6], %s642
        %s644 = sand.u32 %s57, 1
        %s645 = smul.addr %s644, 8
        %s646 = scalar_lea.vmem [#allocation5], %s645
        // Predicated region
        $region93: #{text_encoder.1} parent=91 // pred_check
          %p647 = pneg %p70
        $region94: #{text_encoder.1} parent=91 // pred_check_branch
          %649 = sbr.rel (%p647) target = $region96
        $region95: #{text_encoder.1} parent=91 // pred_region
          %651 = dma.done %s643, 128
        $region96: #{text_encoder.1} parent=91 // pred_fallthru
          _
        // Predicated region
        $region97: #{text_encoder.1} parent=91 // pred_check
          %p652 = pneg %p91
        $region98: #{text_encoder.1} parent=91 // pred_check_branch
          %654 = sbr.rel (%p652) target = $region100
        $region99: #{text_encoder.1} parent=91 // pred_region
          %656 = dma.done [#allocation9], 128
        $region100: #{text_encoder.1} parent=91 // pred_fallthru
          _
        // Predicated region
        $region101: #{text_encoder.1} parent=91 // pred_check
          %p657 = pneg %p112
        $region102: #{text_encoder.1} parent=91 // pred_check_branch
          %659 = sbr.rel (%p657) target = $region104
        $region103: #{text_encoder.1} parent=91 // pred_region
          %661 = dma.done [#allocation9], 128
        $region104: #{text_encoder.1} parent=91 // pred_fallthru
          _
        // Predicated region
        $region105: #{text_encoder.1} parent=91 // pred_check
          %p662 = pneg %p196
        $region106: #{text_encoder.1} parent=91 // pred_check_branch
          %664 = sbr.rel (%p662) target = $region108
        $region107: #{text_encoder.1} parent=91 // pred_region
          %666 = dma.done [#allocation12], 96
        $region108: #{text_encoder.1} parent=91 // pred_fallthru
          _
        // Predicated region
        $region109: #{text_encoder.1} parent=91 // pred_check
          %p667 = pneg %p238
        $region110: #{text_encoder.1} parent=91 // pred_check_branch
          %669 = sbr.rel (%p667) target = $region112
        $region111: #{text_encoder.1} parent=91 // pred_region
          %671 = dma.done [#allocation12], 32
        $region112: #{text_encoder.1} parent=91 // pred_fallthru
          _
        // Predicated region
        $region113: #{text_encoder.1} parent=91 // pred_check
          %p672 = pneg %p259
        $region114: #{text_encoder.1} parent=91 // pred_check_branch
          %674 = sbr.rel (%p672) target = $region116
        $region115: #{text_encoder.1} parent=91 // pred_region
          %676 = dma.done [#allocation15], 32
        $region116: #{text_encoder.1} parent=91 // pred_fallthru
          _
        // Predicated region
        $region117: #{text_encoder.1} parent=91 // pred_check
          %p677 = pneg %p280
        $region118: #{text_encoder.1} parent=91 // pred_check_branch
          %679 = sbr.rel (%p677) target = $region120
        $region119: #{text_encoder.1} parent=91 // pred_region
          %681 = dma.done [#allocation15], 32
        $region120: #{text_encoder.1} parent=91 // pred_fallthru
          _
        // Predicated region
        $region121: #{text_encoder.1} parent=91 // pred_check
          %p682 = pneg %p322
        $region122: #{text_encoder.1} parent=91 // pred_check_branch
          %684 = sbr.rel (%p682) target = $region124
        $region123: #{text_encoder.1} parent=91 // pred_region
          %686 = dma.done [#allocation18], 32
        $region124: #{text_encoder.1} parent=91 // pred_fallthru
          _
        // Predicated region
        $region125: #{text_encoder.1} parent=91 // pred_check
          %p687 = pneg %p364
        $region126: #{text_encoder.1} parent=91 // pred_check_branch
          %689 = sbr.rel (%p687) target = $region128
        $region127: #{text_encoder.1} parent=91 // pred_region
          %691 = dma.done [#allocation18], 32
        $region128: #{text_encoder.1} parent=91 // pred_fallthru
          _
        // Predicated region
        $region129: #{text_encoder.1} parent=91 // pred_check
          %p692 = pneg %p406
        $region130: #{text_encoder.1} parent=91 // pred_check_branch
          %694 = sbr.rel (%p692) target = $region132
        $region131: #{text_encoder.1} parent=91 // pred_region
          %696 = dma.done [#allocation21], 16
        $region132: #{text_encoder.1} parent=91 // pred_fallthru
          _
        %s697 = sand.u32 %s57, 1
        %s698 = scalar_lea.sflag [#allocation6], %s697
        %s699 = sand.u32 %s57, 1
        %s700 = smul.addr %s699, 8
        %s701 = scalar_lea.vmem [#allocation5], %s700
        %p702 = pneg %p70
        %p703 = pneg %p67
        %p704 = pneg %p91
        %p705 = pneg %p88
        %p706 = pneg %p112
        %p707 = pneg %p109
        %p708 = pneg %p133
        %p709 = pneg %p130
        %p710 = pneg %p154
        %p711 = pneg %p151
        %p712 = pneg %p175
        %p713 = pneg %p172
        %p714 = pneg %p196
        %p715 = pneg %p193
        %p716 = pneg %p217
        %p717 = pneg %p214
        %p718 = pneg %p238
        %p719 = pneg %p235
        %p720 = pneg %p259
        %p721 = pneg %p256
        %p722 = pneg %p280
        %p723 = pneg %p277
        %p724 = pneg %p301
        %p725 = pneg %p298
        %p726 = pneg %p322
        %p727 = pneg %p319
        %p728 = pneg %p343
        %p729 = pneg %p340
        %p730 = pneg %p364
        %p731 = pneg %p361
        %p732 = pneg %p385
        %p733 = pneg %p382
        %p734 = pneg %p406
        %p735 = pneg %p403
        %p736 = pneg %p427
        %p737 = pneg %p424
        %p738 = pneg %p453
        %p739 = pneg %p450
        %s740 = sand.u32 %s440, 1
        %s741 = scalar_lea.sflag [#allocation7], %s740
        %s742 = sand.u32 %s440, 1
        %s743 = scalar_lea.vmem [#allocation22], %s742
        %v744 = vld [vmem:[#allocation10] sm:$0xff]
        %v745 = vld [vmem:[%s646] sm:$0xff]
        %v746 = vld [vmem:[#allocation8] sm:$0xff]
        %v747 = vadd.f32 %v745, %v746
        %v748 = vld [vmem:[%s4] sm:$0x1]
        %v749 = vld [vmem:[%s5] sm:$0x1]
        %vm750 = vcmask 261120
        %v751 = vsel %vm750, %v747, 0.0
        %752 = vadd.xlane.f32.xlu0 %v751
        %v753 = vpop.xlane.xlu0 %752
        %v754 = vrcp.pop 32.0
        %v755 = vmul.f32 32.0, %v754
        %v756 = vsub.f32 1.0, %v755
        %v757 = vmul.f32 %v754, %v756
        %v758 = vadd.f32 %v754, %v757
        %vm759 = vweird.f32 %v754
        %v760 = vsel %vm759, %v754, %v758
        %v761 = vmul.f32 %v753, %v760
        %v762 = vsub.f32 %v747, %v761
        %v763 = vmul.f32 %v762, %v762
        %v764 = vsel %vm750, %v763, 0.0
        %765 = vadd.xlane.f32.xlu0 %v764
        %v766 = vpop.xlane.xlu0 %765
        %v767 = vmul.f32 %v766, %v760
        %v768 = vadd.f32 %v767, 1e-05
        %v769 = vrsqrt.pop %v768
        %v770 = vmul.f32 %v769, %v768
        %v771 = vmul.f32 %v770, %v769
        %v772 = vmul.f32 0.5, %v771
        %v773 = vsub.f32 1.5, %v772
        %v774 = vmul.f32 %v769, %v773
        %vm775 = vweird.f32 %v768
        %vm776 = vweird.f32 %v769
        %vm777 = vmor %vm775, %vm776
        %v778 = vsel %vm777, %v769, %v774
        %v779 = vmul.f32 %v762, %v778
        %v781 = vperm.slane %v748, 0
        %v783 = vmul.f32 %v779, %v781
        %v785 = vperm.slane %v749, 0
        %v787 = vadd.f32 %v783, %v785
        %v788 = vld [vmem:[%s6] sm:$0xff]
        %v789 = vld [vmem:[%s6 + $0x8] sm:$0xff]
        %v790 = vld [vmem:[%s6 + $0x10] sm:$0xff]
        %v791 = vld [vmem:[%s6 + $0x18] sm:$0xff]
        %v792 = vld [vmem:[#allocation11] sm:$0x1]
        %v794 = vperm.slane %v792, 0
        %v797 = vsel %vm750, %v787, 0
        %799 = vmatpush.msra.mxu0 0.0
        %800 = vmatpush.msra.mxu0 0.0
        %801 = vmatpush.msra.mxu0 0.0
        %802 = vmatpush.msra.mxu0 0.0
        %803 = vmatpush.msra.mxu0 0.0
        %804 = vmatpush.msra.mxu0 0.0
        %805 = vmatpush.msra.mxu0 0.0
        %806 = vmatpush.msra.mxu0 0.0
        %807 = vmatpush.msra.mxu0 0.0
        %808 = vmatpush.msra.mxu0 0.0
        %809 = vmatpush.msra.mxu0 0.0
        %810 = vmatpush.msra.mxu0 0.0
        %811 = vmatpush.msra.mxu0 %v791
        %812 = vmatpush.msra.mxu0 %v790
        %813 = vmatpush.msra.mxu0 %v789
        %814 = vmatpush.msra.mxu0 %v788
        %815 = vmatmul.f32.gmra.mxu0 %v797
        %v816 = vpop.f32.mrf.mxu0
        %v817 = vadd.f32 %v794, %v816
        %818 = vdwg.mxu0
        %s819 = scalar_lea.vmem %s6, 32
        %v820 = vld [vmem:[%s819] sm:$0xff]
        %v821 = vld [vmem:[%s819 + $0x8] sm:$0xff]
        %v822 = vld [vmem:[%s819 + $0x10] sm:$0xff]
        %v823 = vld [vmem:[%s819 + $0x18] sm:$0xff]
        %s824 = scalar_lea.vmem [#allocation11], 1
        %v825 = vld [vmem:[%s824] sm:$0x1]
        %v827 = vperm.slane %v825, 0
        %829 = vmatpush.msra.mxu0 0.0
        %830 = vmatpush.msra.mxu0 0.0
        %831 = vmatpush.msra.mxu0 0.0
        %832 = vmatpush.msra.mxu0 0.0
        %833 = vmatpush.msra.mxu0 0.0
        %834 = vmatpush.msra.mxu0 0.0
        %835 = vmatpush.msra.mxu0 0.0
        %836 = vmatpush.msra.mxu0 0.0
        %837 = vmatpush.msra.mxu0 0.0
        %838 = vmatpush.msra.mxu0 0.0
        %839 = vmatpush.msra.mxu0 0.0
        %840 = vmatpush.msra.mxu0 0.0
        %841 = vmatpush.msra.mxu0 %v823
        %842 = vmatpush.msra.mxu0 %v822
        %843 = vmatpush.msra.mxu0 %v821
        %844 = vmatpush.msra.mxu0 %v820
        %845 = vmatmul.f32.gmra.mxu0 %v797
        %v846 = vpop.f32.mrf.mxu0
        %v847 = vadd.f32 %v827, %v846
        %848 = vdwg.mxu0
        %s849 = scalar_lea.vmem %s6, 64
        %v850 = vld [vmem:[%s849] sm:$0xff]
        %v851 = vld [vmem:[%s849 + $0x8] sm:$0xff]
        %v852 = vld [vmem:[%s849 + $0x10] sm:$0xff]
        %v853 = vld [vmem:[%s849 + $0x18] sm:$0xff]
        %s854 = scalar_lea.vmem [#allocation11], 2
        %v855 = vld [vmem:[%s854] sm:$0x1]
        %v857 = vperm.slane %v855, 0
        %859 = vmatpush.msra.mxu0 0.0
        %860 = vmatpush.msra.mxu0 0.0
        %861 = vmatpush.msra.mxu0 0.0
        %862 = vmatpush.msra.mxu0 0.0
        %863 = vmatpush.msra.mxu0 0.0
        %864 = vmatpush.msra.mxu0 0.0
        %865 = vmatpush.msra.mxu0 0.0
        %866 = vmatpush.msra.mxu0 0.0
        %867 = vmatpush.msra.mxu0 0.0
        %868 = vmatpush.msra.mxu0 0.0
        %869 = vmatpush.msra.mxu0 0.0
        %870 = vmatpush.msra.mxu0 0.0
        %871 = vmatpush.msra.mxu0 %v853
        %872 = vmatpush.msra.mxu0 %v852
        %873 = vmatpush.msra.mxu0 %v851
        %874 = vmatpush.msra.mxu0 %v850
        %875 = vmatmul.f32.gmra.mxu0 %v797
        %v876 = vpop.f32.mrf.mxu0
        %v877 = vadd.f32 %v857, %v876
        %878 = vdwg.mxu0
        %vm879 = vcmask 64512
        %v881 = vsel %vm879, %v817, 0
        %v884 = vsel %vm879, %v847, 0
        %886 = vmatpush.xpose.msra.mxu0 0.0
        %887 = vmatpush.xpose.msra.mxu0 0.0
        %888 = vmatpush.xpose.msra.mxu0 0.0
        %889 = vmatpush.xpose.msra.mxu0 0.0
        %890 = vmatpush.xpose.msra.mxu0 0.0
        %891 = vmatpush.xpose.msra.mxu0 0.0
        %892 = vmatpush.xpose.msra.mxu0 0.0
        %893 = vmatpush.xpose.msra.mxu0 0.0
        %894 = vmatpush.xpose.msra.mxu0 0.0
        %895 = vmatpush.xpose.msra.mxu0 0.0
        %896 = vmatpush.xpose.msra.mxu0 0.0
        %897 = vmatpush.xpose.msra.mxu0 0.0
        %898 = vmatpush.xpose.msra.mxu0 0.0
        %899 = vmatpush.xpose.msra.mxu0 0.0
        %900 = vmatpush.xpose.msra.mxu0 0.0
        %901 = vmatpush.xpose.msra.mxu0 %v884
        %902 = vmatmul.f32.gmra.mxu0 %v881
        %v903 = vpop.f32.mrf.mxu0
        %v904 = vadd.f32 0.0, %v903
        %905 = vdwg.mxu0
        %v906 = vmul.f32 %v904, 0.35355338
        %v907 = vadd.f32 %v906, %v744
        %908 = vrot.lane.b32.xlu0 %v817, 120
        %v909 = vpop.permute.xlu0 %908
        %910 = vrot.lane.b32.xlu0 %v847, 120
        %v911 = vpop.permute.xlu0 %910
        %v912 = vsel %vm879, %v909, 0
        %v914 = vsel %vm879, %v911, 0
        %916 = vmatpush.xpose.msra.mxu0 0.0
        %917 = vmatpush.xpose.msra.mxu0 0.0
        %918 = vmatpush.xpose.msra.mxu0 0.0
        %919 = vmatpush.xpose.msra.mxu0 0.0
        %920 = vmatpush.xpose.msra.mxu0 0.0
        %921 = vmatpush.xpose.msra.mxu0 0.0
        %922 = vmatpush.xpose.msra.mxu0 0.0
        %923 = vmatpush.xpose.msra.mxu0 0.0
        %924 = vmatpush.xpose.msra.mxu0 0.0
        %925 = vmatpush.xpose.msra.mxu0 0.0
        %926 = vmatpush.xpose.msra.mxu0 0.0
        %927 = vmatpush.xpose.msra.mxu0 0.0
        %928 = vmatpush.xpose.msra.mxu0 0.0
        %929 = vmatpush.xpose.msra.mxu0 0.0
        %930 = vmatpush.xpose.msra.mxu0 0.0
        %931 = vmatpush.xpose.msra.mxu0 %v914
        %932 = vmatmul.f32.gmra.mxu0 %v912
        %v933 = vpop.f32.mrf.mxu0
        %v934 = vadd.f32 0.0, %v933
        %935 = vdwg.mxu0
        %v936 = vmul.f32 %v934, 0.35355338
        %v937 = vadd.f32 %v936, %v744
        %938 = vrot.lane.b32.xlu0 %v817, 112
        %v939 = vpop.permute.xlu0 %938
        %940 = vrot.lane.b32.xlu0 %v847, 112
        %v941 = vpop.permute.xlu0 %940
        %v942 = vsel %vm879, %v939, 0
        %v944 = vsel %vm879, %v941, 0
        %946 = vmatpush.xpose.msra.mxu0 0.0
        %947 = vmatpush.xpose.msra.mxu0 0.0
        %948 = vmatpush.xpose.msra.mxu0 0.0
        %949 = vmatpush.xpose.msra.mxu0 0.0
        %950 = vmatpush.xpose.msra.mxu0 0.0
        %951 = vmatpush.xpose.msra.mxu0 0.0
        %952 = vmatpush.xpose.msra.mxu0 0.0
        %953 = vmatpush.xpose.msra.mxu0 0.0
        %954 = vmatpush.xpose.msra.mxu0 0.0
        %955 = vmatpush.xpose.msra.mxu0 0.0
        %956 = vmatpush.xpose.msra.mxu0 0.0
        %957 = vmatpush.xpose.msra.mxu0 0.0
        %958 = vmatpush.xpose.msra.mxu0 0.0
        %959 = vmatpush.xpose.msra.mxu0 0.0
        %960 = vmatpush.xpose.msra.mxu0 0.0
        %961 = vmatpush.xpose.msra.mxu0 %v944
        %962 = vmatmul.f32.gmra.mxu0 %v942
        %v963 = vpop.f32.mrf.mxu0
        %v964 = vadd.f32 0.0, %v963
        %965 = vdwg.mxu0
        %v966 = vmul.f32 %v964, 0.35355338
        %v967 = vadd.f32 %v966, %v744
        %968 = vrot.lane.b32.xlu0 %v817, 104
        %v969 = vpop.permute.xlu0 %968
        %970 = vrot.lane.b32.xlu0 %v847, 104
        %v971 = vpop.permute.xlu0 %970
        %v972 = vsel %vm879, %v969, 0
        %v974 = vsel %vm879, %v971, 0
        %976 = vmatpush.xpose.msra.mxu0 0.0
        %977 = vmatpush.xpose.msra.mxu0 0.0
        %978 = vmatpush.xpose.msra.mxu0 0.0
        %979 = vmatpush.xpose.msra.mxu0 0.0
        %980 = vmatpush.xpose.msra.mxu0 0.0
        %981 = vmatpush.xpose.msra.mxu0 0.0
        %982 = vmatpush.xpose.msra.mxu0 0.0
        %983 = vmatpush.xpose.msra.mxu0 0.0
        %984 = vmatpush.xpose.msra.mxu0 0.0
        %985 = vmatpush.xpose.msra.mxu0 0.0
        %986 = vmatpush.xpose.msra.mxu0 0.0
        %987 = vmatpush.xpose.msra.mxu0 0.0
        %988 = vmatpush.xpose.msra.mxu0 0.0
        %989 = vmatpush.xpose.msra.mxu0 0.0
        %990 = vmatpush.xpose.msra.mxu0 0.0
        %991 = vmatpush.xpose.msra.mxu0 %v974
        %992 = vmatmul.f32.gmra.mxu0 %v972
        %v993 = vpop.f32.mrf.mxu0
        %v994 = vadd.f32 0.0, %v993
        %995 = vdwg.mxu0
        %v996 = vmul.f32 %v994, 0.35355338
        %v997 = vadd.f32 %v996, %v744
        %v998 = vsel %vm879, %v907, -inf
        %999 = vmax.xlane.f32.xlu0 %v998
        %v1000 = vpop.xlane.xlu0 %999
        %v1001 = vsel %vm879, %v937, -inf
        %1002 = vmax.xlane.f32.xlu0 %v1001
        %v1003 = vpop.xlane.xlu0 %1002
        %v1004 = vsel %vm879, %v967, -inf
        %1005 = vmax.xlane.f32.xlu0 %v1004
        %v1006 = vpop.xlane.xlu0 %1005
        %v1007 = vsel %vm879, %v997, -inf
        %1008 = vmax.xlane.f32.xlu0 %v1007
        %v1009 = vpop.xlane.xlu0 %1008
        %v1010 = vsub.f32 %v907, %v1000
        %v1011 = vsub.f32 %v937, %v1003
        %v1012 = vsub.f32 %v967, %v1006
        %v1013 = vsub.f32 %v997, %v1009
        %v1014 = vmul.f32 %v1010, 1.442695
        %v1015 = vpow.pop %v1014
        %v1016 = vmul.f32 %v1011, 1.442695
        %v1017 = vpow.pop %v1016
        %v1018 = vmul.f32 %v1012, 1.442695
        %v1019 = vpow.pop %v1018
        %v1020 = vmul.f32 %v1013, 1.442695
        %v1021 = vpow.pop %v1020
        %v1022 = vsel %vm879, %v1015, 0.0
        %1023 = vadd.xlane.f32.xlu0 %v1022
        %v1024 = vpop.xlane.xlu0 %1023
        %v1025 = vsel %vm879, %v1017, 0.0
        %1026 = vadd.xlane.f32.xlu0 %v1025
        %v1027 = vpop.xlane.xlu0 %1026
        %v1028 = vsel %vm879, %v1019, 0.0
        %1029 = vadd.xlane.f32.xlu0 %v1028
        %v1030 = vpop.xlane.xlu0 %1029
        %v1031 = vsel %vm879, %v1021, 0.0
        %1032 = vadd.xlane.f32.xlu0 %v1031
        %v1033 = vpop.xlane.xlu0 %1032
        %v1034 = vrcp.pop %v1024
        %v1035 = vmul.f32 %v1024, %v1034
        %v1036 = vsub.f32 1.0, %v1035
        %v1037 = vmul.f32 %v1034, %v1036
        %v1038 = vadd.f32 %v1034, %v1037
        %vm1039 = vweird.f32 %v1024
        %vm1040 = vweird.f32 %v1034
        %vm1041 = vmor %vm1039, %vm1040
        %v1042 = vsel %vm1041, %v1034, %v1038
        %v1043 = vand.u32 2147483647, %v1024
        %vm1044 = vcmp.eq.f32.partialorder %v1043, 8.507059e+37
        %v1045 = vand.u32 %v1024, 2147483648
        %v1046 = vor.u32 1.1754944e-38, %v1045
        %v1047 = vsel %vm1044, %v1046, %v1042
        %v1048 = vmul.f32 %v1015, %v1047
        %v1049 = vrcp.pop %v1027
        %v1050 = vmul.f32 %v1027, %v1049
        %v1051 = vsub.f32 1.0, %v1050
        %v1052 = vmul.f32 %v1049, %v1051
        %v1053 = vadd.f32 %v1049, %v1052
        %vm1054 = vweird.f32 %v1027
        %vm1055 = vweird.f32 %v1049
        %vm1056 = vmor %vm1054, %vm1055
        %v1057 = vsel %vm1056, %v1049, %v1053
        %v1058 = vand.u32 2147483647, %v1027
        %vm1059 = vcmp.eq.f32.partialorder %v1058, 8.507059e+37
        %v1060 = vand.u32 %v1027, 2147483648
        %v1061 = vor.u32 1.1754944e-38, %v1060
        %v1062 = vsel %vm1059, %v1061, %v1057
        %v1063 = vmul.f32 %v1017, %v1062
        %v1064 = vrcp.pop %v1030
        %v1065 = vmul.f32 %v1030, %v1064
        %v1066 = vsub.f32 1.0, %v1065
        %v1067 = vmul.f32 %v1064, %v1066
        %v1068 = vadd.f32 %v1064, %v1067
        %vm1069 = vweird.f32 %v1030
        %vm1070 = vweird.f32 %v1064
        %vm1071 = vmor %vm1069, %vm1070
        %v1072 = vsel %vm1071, %v1064, %v1068
        %v1073 = vand.u32 2147483647, %v1030
        %vm1074 = vcmp.eq.f32.partialorder %v1073, 8.507059e+37
        %v1075 = vand.u32 %v1030, 2147483648
        %v1076 = vor.u32 1.1754944e-38, %v1075
        %v1077 = vsel %vm1074, %v1076, %v1072
        %v1078 = vmul.f32 %v1019, %v1077
        %v1079 = vrcp.pop %v1033
        %v1080 = vmul.f32 %v1033, %v1079
        %v1081 = vsub.f32 1.0, %v1080
        %v1082 = vmul.f32 %v1079, %v1081
        %v1083 = vadd.f32 %v1079, %v1082
        %vm1084 = vweird.f32 %v1033
        %vm1085 = vweird.f32 %v1079
        %vm1086 = vmor %vm1084, %vm1085
        %v1087 = vsel %vm1086, %v1079, %v1083
        %v1088 = vand.u32 2147483647, %v1033
        %vm1089 = vcmp.eq.f32.partialorder %v1088, 8.507059e+37
        %v1090 = vand.u32 %v1033, 2147483648
        %v1091 = vor.u32 1.1754944e-38, %v1090
        %v1092 = vsel %vm1089, %v1091, %v1087
        %v1093 = vmul.f32 %v1021, %v1092
        %v1095 = vsel %vm879, %v1048, 0
        %1097 = vmatpush.msra.mxu0 0.0
        %1098 = vmatpush.msra.mxu0 0.0
        %1099 = vmatpush.msra.mxu0 0.0
        %1100 = vmatpush.msra.mxu0 0.0
        %1101 = vmatpush.msra.mxu0 0.0
        %1102 = vmatpush.msra.mxu0 0.0
        %1103 = vmatpush.msra.mxu0 0.0
        %1104 = vmatpush.msra.mxu0 0.0
        %1105 = vmatpush.msra.mxu0 0.0
        %1106 = vmatpush.msra.mxu0 0.0
        %1107 = vmatpush.msra.mxu0 0.0
        %1108 = vmatpush.msra.mxu0 0.0
        %1109 = vmatpush.msra.mxu0 0.0
        %1110 = vmatpush.msra.mxu0 0.0
        %1111 = vmatpush.msra.mxu0 0.0
        %1112 = vmatpush.msra.mxu0 %v877
        %1113 = vmatmul.f32.gmra.mxu0 %v1095
        %v1114 = vpop.f32.mrf.mxu0
        %v1115 = vadd.f32 0.0, %v1114
        %1116 = vdwg.mxu0
        %1118 = vrot.lane.b32.xlu0 %v877, 120
        %v1119 = vpop.permute.xlu0 %1118
        %v1122 = vsel %vm879, %v1063, 0
        %1124 = vmatpush.msra.mxu0 0.0
        %1125 = vmatpush.msra.mxu0 0.0
        %1126 = vmatpush.msra.mxu0 0.0
        %1127 = vmatpush.msra.mxu0 0.0
        %1128 = vmatpush.msra.mxu0 0.0
        %1129 = vmatpush.msra.mxu0 0.0
        %1130 = vmatpush.msra.mxu0 0.0
        %1131 = vmatpush.msra.mxu0 0.0
        %1132 = vmatpush.msra.mxu0 0.0
        %1133 = vmatpush.msra.mxu0 0.0
        %1134 = vmatpush.msra.mxu0 0.0
        %1135 = vmatpush.msra.mxu0 0.0
        %1136 = vmatpush.msra.mxu0 0.0
        %1137 = vmatpush.msra.mxu0 0.0
        %1138 = vmatpush.msra.mxu0 0.0
        %1139 = vmatpush.msra.mxu0 %v1119
        %1140 = vmatmul.f32.gmra.mxu0 %v1122
        %v1141 = vpop.f32.mrf.mxu0
        %v1142 = vadd.f32 0.0, %v1141
        %1143 = vdwg.mxu0
        %1144 = vrot.lane.b32.xlu0 %v877, 112
        %v1145 = vpop.permute.xlu0 %1144
        %v1148 = vsel %vm879, %v1078, 0
        %1150 = vmatpush.msra.mxu0 0.0
        %1151 = vmatpush.msra.mxu0 0.0
        %1152 = vmatpush.msra.mxu0 0.0
        %1153 = vmatpush.msra.mxu0 0.0
        %1154 = vmatpush.msra.mxu0 0.0
        %1155 = vmatpush.msra.mxu0 0.0
        %1156 = vmatpush.msra.mxu0 0.0
        %1157 = vmatpush.msra.mxu0 0.0
        %1158 = vmatpush.msra.mxu0 0.0
        %1159 = vmatpush.msra.mxu0 0.0
        %1160 = vmatpush.msra.mxu0 0.0
        %1161 = vmatpush.msra.mxu0 0.0
        %1162 = vmatpush.msra.mxu0 0.0
        %1163 = vmatpush.msra.mxu0 0.0
        %1164 = vmatpush.msra.mxu0 0.0
        %1165 = vmatpush.msra.mxu0 %v1145
        %1166 = vmatmul.f32.gmra.mxu0 %v1148
        %v1167 = vpop.f32.mrf.mxu0
        %v1168 = vadd.f32 0.0, %v1167
        %1169 = vdwg.mxu0
        %1170 = vrot.lane.b32.xlu0 %v877, 104
        %v1171 = vpop.permute.xlu0 %1170
        %v1174 = vsel %vm879, %v1093, 0
        %1176 = vmatpush.msra.mxu0 0.0
        %1177 = vmatpush.msra.mxu0 0.0
        %1178 = vmatpush.msra.mxu0 0.0
        %1179 = vmatpush.msra.mxu0 0.0
        %1180 = vmatpush.msra.mxu0 0.0
        %1181 = vmatpush.msra.mxu0 0.0
        %1182 = vmatpush.msra.mxu0 0.0
        %1183 = vmatpush.msra.mxu0 0.0
        %1184 = vmatpush.msra.mxu0 0.0
        %1185 = vmatpush.msra.mxu0 0.0
        %1186 = vmatpush.msra.mxu0 0.0
        %1187 = vmatpush.msra.mxu0 0.0
        %1188 = vmatpush.msra.mxu0 0.0
        %1189 = vmatpush.msra.mxu0 0.0
        %1190 = vmatpush.msra.mxu0 0.0
        %1191 = vmatpush.msra.mxu0 %v1171
        %1192 = vmatmul.f32.gmra.mxu0 %v1174
        %v1193 = vpop.f32.mrf.mxu0
        %v1194 = vadd.f32 0.0, %v1193
        %1195 = vdwg.mxu0
        %1197 = vrot.lane.b32.xlu0 %v1142, 8
        %v1198 = vpop.permute.xlu0 %1197
        %1201 = vrot.lane.b32.xlu0 %v1168, 16
        %v1202 = vpop.permute.xlu0 %1201
        %1205 = vrot.lane.b32.xlu0 %v1194, 24
        %v1206 = vpop.permute.xlu0 %1205
        %v1208 = vsel %vm879, %v1115, %v1198
        %vm1209 = vcmask 130048
        %v1210 = vsel %vm1209, %v1208, %v1202
        %vm1211 = vcmask 195584
        %v1212 = vsel %vm1211, %v1210, %v1206
        %v1213 = vld [vmem:[%s8] sm:$0xff]
        %v1214 = vld [vmem:[%s8 + $0x8] sm:$0xff]
        %v1215 = vld [vmem:[%s8 + $0x10] sm:$0xff]
        %v1216 = vld [vmem:[%s8 + $0x18] sm:$0xff]
        %v1218 = vsel %vm750, %v1212, 0
        %1220 = vmatpush.msra.mxu0 0.0
        %1221 = vmatpush.msra.mxu0 0.0
        %1222 = vmatpush.msra.mxu0 0.0
        %1223 = vmatpush.msra.mxu0 0.0
        %1224 = vmatpush.msra.mxu0 0.0
        %1225 = vmatpush.msra.mxu0 0.0
        %1226 = vmatpush.msra.mxu0 0.0
        %1227 = vmatpush.msra.mxu0 0.0
        %1228 = vmatpush.msra.mxu0 0.0
        %1229 = vmatpush.msra.mxu0 0.0
        %1230 = vmatpush.msra.mxu0 0.0
        %1231 = vmatpush.msra.mxu0 0.0
        %1232 = vmatpush.msra.mxu0 %v1216
        %1233 = vmatpush.msra.mxu0 %v1215
        %1234 = vmatpush.msra.mxu0 %v1214
        %1235 = vmatpush.msra.mxu0 %v1213
        %1236 = vmatmul.f32.gmra.mxu0 %v1218
        %v1237 = vpop.f32.mrf.mxu0
        %v1238 = vadd.f32 0.0, %v1237
        %1239 = vdwg.mxu0
        %v1240 = vadd.f32 %v747, %v1238
        %v1241 = vld [vmem:[#allocation13] sm:$0x1]
        %v1243 = vperm.slane %v1241, 0
        %v1245 = vadd.f32 %v1240, %v1243
        %v1246 = vld [vmem:[#allocation14] sm:$0x1]
        %v1247 = vld [vmem:[#allocation16] sm:$0x1]
        %v1248 = vsel %vm750, %v1245, 0.0
        %1249 = vadd.xlane.f32.xlu0 %v1248
        %v1250 = vpop.xlane.xlu0 %1249
        %v1251 = vmul.f32 %v1250, %v760
        %v1252 = vsub.f32 %v1245, %v1251
        %v1253 = vmul.f32 %v1252, %v1252
        %v1254 = vsel %vm750, %v1253, 0.0
        %1255 = vadd.xlane.f32.xlu0 %v1254
        %v1256 = vpop.xlane.xlu0 %1255
        %v1257 = vmul.f32 %v1256, %v760
        %v1258 = vadd.f32 %v1257, 1e-05
        %v1259 = vrsqrt.pop %v1258
        %v1260 = vmul.f32 %v1259, %v1258
        %v1261 = vmul.f32 %v1260, %v1259
        %v1262 = vmul.f32 0.5, %v1261
        %v1263 = vsub.f32 1.5, %v1262
        %v1264 = vmul.f32 %v1259, %v1263
        %vm1265 = vweird.f32 %v1258
        %vm1266 = vweird.f32 %v1259
        %vm1267 = vmor %vm1265, %vm1266
        %v1268 = vsel %vm1267, %v1259, %v1264
        %v1269 = vmul.f32 %v1252, %v1268
        %v1271 = vperm.slane %v1246, 0
        %v1273 = vmul.f32 %v1269, %v1271
        %v1275 = vperm.slane %v1247, 0
        %v1277 = vadd.f32 %v1273, %v1275
        %v1278 = vld [vmem:[%s12] sm:$0xff]
        %v1279 = vld [vmem:[%s12 + $0x8] sm:$0xff]
        %v1280 = vld [vmem:[%s12 + $0x10] sm:$0xff]
        %v1281 = vld [vmem:[%s12 + $0x18] sm:$0xff]
        %v1282 = vld [vmem:[#allocation17] sm:$0x1]
        %v1284 = vperm.slane %v1282, 0
        %v1287 = vsel %vm750, %v1277, 0
        %1289 = vmatpush.msra.mxu0 0.0
        %1290 = vmatpush.msra.mxu0 0.0
        %1291 = vmatpush.msra.mxu0 0.0
        %1292 = vmatpush.msra.mxu0 0.0
        %1293 = vmatpush.msra.mxu0 0.0
        %1294 = vmatpush.msra.mxu0 0.0
        %1295 = vmatpush.msra.mxu0 0.0
        %1296 = vmatpush.msra.mxu0 0.0
        %1297 = vmatpush.msra.mxu0 0.0
        %1298 = vmatpush.msra.mxu0 0.0
        %1299 = vmatpush.msra.mxu0 0.0
        %1300 = vmatpush.msra.mxu0 0.0
        %1301 = vmatpush.msra.mxu0 %v1281
        %1302 = vmatpush.msra.mxu0 %v1280
        %1303 = vmatpush.msra.mxu0 %v1279
        %1304 = vmatpush.msra.mxu0 %v1278
        %1305 = vmatmul.f32.gmra.mxu0 %v1287
        %v1306 = vpop.f32.mrf.mxu0
        %v1307 = vadd.f32 %v1284, %v1306
        %1308 = vdwg.mxu0
        %v1309 = vmul.f32 %v1307, 1.702
        %v1310 = vxor.u32 %v1309, 2147483648
        %v1311 = vmul.f32 %v1310, 1.442695
        %v1312 = vpow.pop %v1311
        %v1313 = vadd.f32 %v1312, 1.0
        %v1314 = vrcp.pop %v1313
        %v1315 = vmul.f32 %v1313, %v1314
        %v1316 = vsub.f32 1.0, %v1315
        %v1317 = vmul.f32 %v1314, %v1316
        %v1318 = vadd.f32 %v1314, %v1317
        %vm1319 = vweird.f32 %v1313
        %vm1320 = vweird.f32 %v1314
        %vm1321 = vmor %vm1319, %vm1320
        %v1322 = vsel %vm1321, %v1314, %v1318
        %v1323 = vand.u32 2147483647, %v1313
        %vm1324 = vcmp.eq.f32.partialorder %v1323, 8.507059e+37
        %v1325 = vand.u32 %v1313, 2147483648
        %v1326 = vor.u32 1.1754944e-38, %v1325
        %v1327 = vsel %vm1324, %v1326, %v1322
        %v1328 = vmul.f32 1.0, %v1327
        %v1329 = vmul.f32 %v1307, %v1328
        %v1330 = vld [vmem:[%s14] sm:$0xff]
        %v1331 = vld [vmem:[%s14 + $0x8] sm:$0xff]
        %v1332 = vld [vmem:[%s14 + $0x10] sm:$0xff]
        %v1333 = vld [vmem:[%s14 + $0x18] sm:$0xff]
        %v1334 = vld [vmem:[%s14 + $0x20] sm:$0xff]
        %v1335 = vld [vmem:[%s14 + $0x28] sm:$0xff]
        %v1336 = vld [vmem:[%s14 + $0x30] sm:$0xff]
        %v1337 = vld [vmem:[%s14 + $0x38] sm:$0xff]
        %v1338 = vld [vmem:[%s14 + $0x40] sm:$0xff]
        %v1339 = vld [vmem:[%s14 + $0x48] sm:$0xff]
        %v1340 = vld [vmem:[%s14 + $0x50] sm:$0xff]
        %v1341 = vld [vmem:[%s14 + $0x58] sm:$0xff]
        %v1342 = vld [vmem:[%s14 + $0x60] sm:$0xff]
        %v1343 = vld [vmem:[%s14 + $0x68] sm:$0xff]
        %v1344 = vld [vmem:[%s14 + $0x70] sm:$0xff]
        %v1345 = vld [vmem:[%s14 + $0x78] sm:$0xff]
        %1346 = vmatpush.msra.mxu0 %v1345
        %1347 = vmatpush.msra.mxu0 %v1344
        %1348 = vmatpush.msra.mxu0 %v1343
        %1349 = vmatpush.msra.mxu0 %v1342
        %1350 = vmatpush.msra.mxu0 %v1341
        %1351 = vmatpush.msra.mxu0 %v1340
        %1352 = vmatpush.msra.mxu0 %v1339
        %1353 = vmatpush.msra.mxu0 %v1338
        %1354 = vmatpush.msra.mxu0 %v1337
        %1355 = vmatpush.msra.mxu0 %v1336
        %1356 = vmatpush.msra.mxu0 %v1335
        %1357 = vmatpush.msra.mxu0 %v1334
        %1358 = vmatpush.msra.mxu0 %v1333
        %1359 = vmatpush.msra.mxu0 %v1332
        %1360 = vmatpush.msra.mxu0 %v1331
        %1361 = vmatpush.msra.mxu0 %v1330
        %1362 = vmatmul.f32.gmra.mxu0 %v1329
        %v1363 = vpop.f32.mrf.mxu0
        %v1364 = vadd.f32 0.0, %v1363
        %1365 = vdwg.mxu0
        %v1366 = vadd.f32 %v1245, %v1364
        %v1367 = vld [vmem:[#allocation19] sm:$0x1]
        %v1369 = vperm.slane %v1367, 0
        %v1371 = vadd.f32 %v1366, %v1369
        %s1372 = scalar_lea.vmem %s4, 1
        %v1373 = vld [vmem:[%s1372] sm:$0x1]
        %s1374 = scalar_lea.vmem %s5, 1
        %v1375 = vld [vmem:[%s1374] sm:$0x1]
        %v1376 = vsel %vm750, %v1371, 0.0
        %1377 = vadd.xlane.f32.xlu0 %v1376
        %v1378 = vpop.xlane.xlu0 %1377
        %v1379 = vmul.f32 %v1378, %v760
        %v1380 = vsub.f32 %v1371, %v1379
        %v1381 = vmul.f32 %v1380, %v1380
        %v1382 = vsel %vm750, %v1381, 0.0
        %1383 = vadd.xlane.f32.xlu0 %v1382
        %v1384 = vpop.xlane.xlu0 %1383
        %v1385 = vmul.f32 %v1384, %v760
        %v1386 = vadd.f32 %v1385, 1e-05
        %v1387 = vrsqrt.pop %v1386
        %v1388 = vmul.f32 %v1387, %v1386
        %v1389 = vmul.f32 %v1388, %v1387
        %v1390 = vmul.f32 0.5, %v1389
        %v1391 = vsub.f32 1.5, %v1390
        %v1392 = vmul.f32 %v1387, %v1391
        %vm1393 = vweird.f32 %v1386
        %vm1394 = vweird.f32 %v1387
        %vm1395 = vmor %vm1393, %vm1394
        %v1396 = vsel %vm1395, %v1387, %v1392
        %v1397 = vmul.f32 %v1380, %v1396
        %v1399 = vperm.slane %v1373, 0
        %v1401 = vmul.f32 %v1397, %v1399
        %v1403 = vperm.slane %v1375, 0
        %v1405 = vadd.f32 %v1401, %v1403
        %s1406 = scalar_lea.vmem %s6, 96
        %v1407 = vld [vmem:[%s1406] sm:$0xff]
        %v1408 = vld [vmem:[%s1406 + $0x8] sm:$0xff]
        %v1409 = vld [vmem:[%s1406 + $0x10] sm:$0xff]
        %v1410 = vld [vmem:[%s1406 + $0x18] sm:$0xff]
        %s1411 = scalar_lea.vmem [#allocation11], 3
        %v1412 = vld [vmem:[%s1411] sm:$0x1]
        %v1414 = vperm.slane %v1412, 0
        %v1417 = vsel %vm750, %v1405, 0
        %1419 = vmatpush.msra.mxu0 0.0
        %1420 = vmatpush.msra.mxu0 0.0
        %1421 = vmatpush.msra.mxu0 0.0
        %1422 = vmatpush.msra.mxu0 0.0
        %1423 = vmatpush.msra.mxu0 0.0
        %1424 = vmatpush.msra.mxu0 0.0
        %1425 = vmatpush.msra.mxu0 0.0
        %1426 = vmatpush.msra.mxu0 0.0
        %1427 = vmatpush.msra.mxu0 0.0
        %1428 = vmatpush.msra.mxu0 0.0
        %1429 = vmatpush.msra.mxu0 0.0
        %1430 = vmatpush.msra.mxu0 0.0
        %1431 = vmatpush.msra.mxu0 %v1410
        %1432 = vmatpush.msra.mxu0 %v1409
        %1433 = vmatpush.msra.mxu0 %v1408
        %1434 = vmatpush.msra.mxu0 %v1407
        %1435 = vmatmul.f32.gmra.mxu0 %v1417
        %v1436 = vpop.f32.mrf.mxu0
        %v1437 = vadd.f32 %v1414, %v1436
        %1438 = vdwg.mxu0
        %s1439 = scalar_lea.vmem %s6, 128
        %v1440 = vld [vmem:[%s1439] sm:$0xff]
        %v1441 = vld [vmem:[%s1439 + $0x8] sm:$0xff]
        %v1442 = vld [vmem:[%s1439 + $0x10] sm:$0xff]
        %v1443 = vld [vmem:[%s1439 + $0x18] sm:$0xff]
        %s1444 = scalar_lea.vmem [#allocation11], 4
        %v1445 = vld [vmem:[%s1444] sm:$0x1]
        %v1447 = vperm.slane %v1445, 0
        %1449 = vmatpush.msra.mxu0 0.0
        %1450 = vmatpush.msra.mxu0 0.0
        %1451 = vmatpush.msra.mxu0 0.0
        %1452 = vmatpush.msra.mxu0 0.0
        %1453 = vmatpush.msra.mxu0 0.0
        %1454 = vmatpush.msra.mxu0 0.0
        %1455 = vmatpush.msra.mxu0 0.0
        %1456 = vmatpush.msra.mxu0 0.0
        %1457 = vmatpush.msra.mxu0 0.0
        %1458 = vmatpush.msra.mxu0 0.0
        %1459 = vmatpush.msra.mxu0 0.0
        %1460 = vmatpush.msra.mxu0 0.0
        %1461 = vmatpush.msra.mxu0 %v1443
        %1462 = vmatpush.msra.mxu0 %v1442
        %1463 = vmatpush.msra.mxu0 %v1441
        %1464 = vmatpush.msra.mxu0 %v1440
        %1465 = vmatmul.f32.gmra.mxu0 %v1417
        %v1466 = vpop.f32.mrf.mxu0
        %v1467 = vadd.f32 %v1447, %v1466
        %1468 = vdwg.mxu0
        %s1469 = scalar_lea.vmem %s6, 160
        %v1470 = vld [vmem:[%s1469] sm:$0xff]
        %v1471 = vld [vmem:[%s1469 + $0x8] sm:$0xff]
        %v1472 = vld [vmem:[%s1469 + $0x10] sm:$0xff]
        %v1473 = vld [vmem:[%s1469 + $0x18] sm:$0xff]
        %s1474 = scalar_lea.vmem [#allocation11], 5
        %v1475 = vld [vmem:[%s1474] sm:$0x1]
        %v1477 = vperm.slane %v1475, 0
        %1479 = vmatpush.msra.mxu0 0.0
        %1480 = vmatpush.msra.mxu0 0.0
        %1481 = vmatpush.msra.mxu0 0.0
        %1482 = vmatpush.msra.mxu0 0.0
        %1483 = vmatpush.msra.mxu0 0.0
        %1484 = vmatpush.msra.mxu0 0.0
        %1485 = vmatpush.msra.mxu0 0.0
        %1486 = vmatpush.msra.mxu0 0.0
        %1487 = vmatpush.msra.mxu0 0.0
        %1488 = vmatpush.msra.mxu0 0.0
        %1489 = vmatpush.msra.mxu0 0.0
        %1490 = vmatpush.msra.mxu0 0.0
        %1491 = vmatpush.msra.mxu0 %v1473
        %1492 = vmatpush.msra.mxu0 %v1472
        %1493 = vmatpush.msra.mxu0 %v1471
        %1494 = vmatpush.msra.mxu0 %v1470
        %1495 = vmatmul.f32.gmra.mxu0 %v1417
        %v1496 = vpop.f32.mrf.mxu0
        %v1497 = vadd.f32 %v1477, %v1496
        %1498 = vdwg.mxu0
        %v1500 = vsel %vm879, %v1437, 0
        %v1503 = vsel %vm879, %v1467, 0
        %1505 = vmatpush.xpose.msra.mxu0 0.0
        %1506 = vmatpush.xpose.msra.mxu0 0.0
        %1507 = vmatpush.xpose.msra.mxu0 0.0
        %1508 = vmatpush.xpose.msra.mxu0 0.0
        %1509 = vmatpush.xpose.msra.mxu0 0.0
        %1510 = vmatpush.xpose.msra.mxu0 0.0
        %1511 = vmatpush.xpose.msra.mxu0 0.0
        %1512 = vmatpush.xpose.msra.mxu0 0.0
        %1513 = vmatpush.xpose.msra.mxu0 0.0
        %1514 = vmatpush.xpose.msra.mxu0 0.0
        %1515 = vmatpush.xpose.msra.mxu0 0.0
        %1516 = vmatpush.xpose.msra.mxu0 0.0
        %1517 = vmatpush.xpose.msra.mxu0 0.0
        %1518 = vmatpush.xpose.msra.mxu0 0.0
        %1519 = vmatpush.xpose.msra.mxu0 0.0
        %1520 = vmatpush.xpose.msra.mxu0 %v1503
        %1521 = vmatmul.f32.gmra.mxu0 %v1500
        %v1522 = vpop.f32.mrf.mxu0
        %v1523 = vadd.f32 0.0, %v1522
        %1524 = vdwg.mxu0
        %v1525 = vmul.f32 %v1523, 0.35355338
        %v1526 = vadd.f32 %v1525, %v744
        %1527 = vrot.lane.b32.xlu0 %v1437, 120
        %v1528 = vpop.permute.xlu0 %1527
        %1529 = vrot.lane.b32.xlu0 %v1467, 120
        %v1530 = vpop.permute.xlu0 %1529
        %v1531 = vsel %vm879, %v1528, 0
        %v1533 = vsel %vm879, %v1530, 0
        %1535 = vmatpush.xpose.msra.mxu0 0.0
        %1536 = vmatpush.xpose.msra.mxu0 0.0
        %1537 = vmatpush.xpose.msra.mxu0 0.0
        %1538 = vmatpush.xpose.msra.mxu0 0.0
        %1539 = vmatpush.xpose.msra.mxu0 0.0
        %1540 = vmatpush.xpose.msra.mxu0 0.0
        %1541 = vmatpush.xpose.msra.mxu0 0.0
        %1542 = vmatpush.xpose.msra.mxu0 0.0
        %1543 = vmatpush.xpose.msra.mxu0 0.0
        %1544 = vmatpush.xpose.msra.mxu0 0.0
        %1545 = vmatpush.xpose.msra.mxu0 0.0
        %1546 = vmatpush.xpose.msra.mxu0 0.0
        %1547 = vmatpush.xpose.msra.mxu0 0.0
        %1548 = vmatpush.xpose.msra.mxu0 0.0
        %1549 = vmatpush.xpose.msra.mxu0 0.0
        %1550 = vmatpush.xpose.msra.mxu0 %v1533
        %1551 = vmatmul.f32.gmra.mxu0 %v1531
        %v1552 = vpop.f32.mrf.mxu0
        %v1553 = vadd.f32 0.0, %v1552
        %1554 = vdwg.mxu0
        %v1555 = vmul.f32 %v1553, 0.35355338
        %v1556 = vadd.f32 %v1555, %v744
        %1557 = vrot.lane.b32.xlu0 %v1437, 112
        %v1558 = vpop.permute.xlu0 %1557
        %1559 = vrot.lane.b32.xlu0 %v1467, 112
        %v1560 = vpop.permute.xlu0 %1559
        %v1561 = vsel %vm879, %v1558, 0
        %v1563 = vsel %vm879, %v1560, 0
        %1565 = vmatpush.xpose.msra.mxu0 0.0
        %1566 = vmatpush.xpose.msra.mxu0 0.0
        %1567 = vmatpush.xpose.msra.mxu0 0.0
        %1568 = vmatpush.xpose.msra.mxu0 0.0
        %1569 = vmatpush.xpose.msra.mxu0 0.0
        %1570 = vmatpush.xpose.msra.mxu0 0.0
        %1571 = vmatpush.xpose.msra.mxu0 0.0
        %1572 = vmatpush.xpose.msra.mxu0 0.0
        %1573 = vmatpush.xpose.msra.mxu0 0.0
        %1574 = vmatpush.xpose.msra.mxu0 0.0
        %1575 = vmatpush.xpose.msra.mxu0 0.0
        %1576 = vmatpush.xpose.msra.mxu0 0.0
        %1577 = vmatpush.xpose.msra.mxu0 0.0
        %1578 = vmatpush.xpose.msra.mxu0 0.0
        %1579 = vmatpush.xpose.msra.mxu0 0.0
        %1580 = vmatpush.xpose.msra.mxu0 %v1563
        %1581 = vmatmul.f32.gmra.mxu0 %v1561
        %v1582 = vpop.f32.mrf.mxu0
        %v1583 = vadd.f32 0.0, %v1582
        %1584 = vdwg.mxu0
        %v1585 = vmul.f32 %v1583, 0.35355338
        %v1586 = vadd.f32 %v1585, %v744
        %1587 = vrot.lane.b32.xlu0 %v1437, 104
        %v1588 = vpop.permute.xlu0 %1587
        %1589 = vrot.lane.b32.xlu0 %v1467, 104
        %v1590 = vpop.permute.xlu0 %1589
        %v1591 = vsel %vm879, %v1588, 0
        %v1593 = vsel %vm879, %v1590, 0
        %1595 = vmatpush.xpose.msra.mxu0 0.0
        %1596 = vmatpush.xpose.msra.mxu0 0.0
        %1597 = vmatpush.xpose.msra.mxu0 0.0
        %1598 = vmatpush.xpose.msra.mxu0 0.0
        %1599 = vmatpush.xpose.msra.mxu0 0.0
        %1600 = vmatpush.xpose.msra.mxu0 0.0
        %1601 = vmatpush.xpose.msra.mxu0 0.0
        %1602 = vmatpush.xpose.msra.mxu0 0.0
        %1603 = vmatpush.xpose.msra.mxu0 0.0
        %1604 = vmatpush.xpose.msra.mxu0 0.0
        %1605 = vmatpush.xpose.msra.mxu0 0.0
        %1606 = vmatpush.xpose.msra.mxu0 0.0
        %1607 = vmatpush.xpose.msra.mxu0 0.0
        %1608 = vmatpush.xpose.msra.mxu0 0.0
        %1609 = vmatpush.xpose.msra.mxu0 0.0
        %1610 = vmatpush.xpose.msra.mxu0 %v1593
        %1611 = vmatmul.f32.gmra.mxu0 %v1591
        %v1612 = vpop.f32.mrf.mxu0
        %v1613 = vadd.f32 0.0, %v1612
        %1614 = vdwg.mxu0
        %v1615 = vmul.f32 %v1613, 0.35355338
        %v1616 = vadd.f32 %v1615, %v744
        %v1617 = vsel %vm879, %v1526, -inf
        %1618 = vmax.xlane.f32.xlu0 %v1617
        %v1619 = vpop.xlane.xlu0 %1618
        %v1620 = vsel %vm879, %v1556, -inf
        %1621 = vmax.xlane.f32.xlu0 %v1620
        %v1622 = vpop.xlane.xlu0 %1621
        %v1623 = vsel %vm879, %v1586, -inf
        %1624 = vmax.xlane.f32.xlu0 %v1623
        %v1625 = vpop.xlane.xlu0 %1624
        %v1626 = vsel %vm879, %v1616, -inf
        %1627 = vmax.xlane.f32.xlu0 %v1626
        %v1628 = vpop.xlane.xlu0 %1627
        %v1629 = vsub.f32 %v1526, %v1619
        %v1630 = vsub.f32 %v1556, %v1622
        %v1631 = vsub.f32 %v1586, %v1625
        %v1632 = vsub.f32 %v1616, %v1628
        %v1633 = vmul.f32 %v1629, 1.442695
        %v1634 = vpow.pop %v1633
        %v1635 = vmul.f32 %v1630, 1.442695
        %v1636 = vpow.pop %v1635
        %v1637 = vmul.f32 %v1631, 1.442695
        %v1638 = vpow.pop %v1637
        %v1639 = vmul.f32 %v1632, 1.442695
        %v1640 = vpow.pop %v1639
        %v1641 = vsel %vm879, %v1634, 0.0
        %1642 = vadd.xlane.f32.xlu0 %v1641
        %v1643 = vpop.xlane.xlu0 %1642
        %v1644 = vsel %vm879, %v1636, 0.0
        %1645 = vadd.xlane.f32.xlu0 %v1644
        %v1646 = vpop.xlane.xlu0 %1645
        %v1647 = vsel %vm879, %v1638, 0.0
        %1648 = vadd.xlane.f32.xlu0 %v1647
        %v1649 = vpop.xlane.xlu0 %1648
        %v1650 = vsel %vm879, %v1640, 0.0
        %1651 = vadd.xlane.f32.xlu0 %v1650
        %v1652 = vpop.xlane.xlu0 %1651
        %v1653 = vrcp.pop %v1643
        %v1654 = vmul.f32 %v1643, %v1653
        %v1655 = vsub.f32 1.0, %v1654
        %v1656 = vmul.f32 %v1653, %v1655
        %v1657 = vadd.f32 %v1653, %v1656
        %vm1658 = vweird.f32 %v1643
        %vm1659 = vweird.f32 %v1653
        %vm1660 = vmor %vm1658, %vm1659
        %v1661 = vsel %vm1660, %v1653, %v1657
        %v1662 = vand.u32 2147483647, %v1643
        %vm1663 = vcmp.eq.f32.partialorder %v1662, 8.507059e+37
        %v1664 = vand.u32 %v1643, 2147483648
        %v1665 = vor.u32 1.1754944e-38, %v1664
        %v1666 = vsel %vm1663, %v1665, %v1661
        %v1667 = vmul.f32 %v1634, %v1666
        %v1668 = vrcp.pop %v1646
        %v1669 = vmul.f32 %v1646, %v1668
        %v1670 = vsub.f32 1.0, %v1669
        %v1671 = vmul.f32 %v1668, %v1670
        %v1672 = vadd.f32 %v1668, %v1671
        %vm1673 = vweird.f32 %v1646
        %vm1674 = vweird.f32 %v1668
        %vm1675 = vmor %vm1673, %vm1674
        %v1676 = vsel %vm1675, %v1668, %v1672
        %v1677 = vand.u32 2147483647, %v1646
        %vm1678 = vcmp.eq.f32.partialorder %v1677, 8.507059e+37
        %v1679 = vand.u32 %v1646, 2147483648
        %v1680 = vor.u32 1.1754944e-38, %v1679
        %v1681 = vsel %vm1678, %v1680, %v1676
        %v1682 = vmul.f32 %v1636, %v1681
        %v1683 = vrcp.pop %v1649
        %v1684 = vmul.f32 %v1649, %v1683
        %v1685 = vsub.f32 1.0, %v1684
        %v1686 = vmul.f32 %v1683, %v1685
        %v1687 = vadd.f32 %v1683, %v1686
        %vm1688 = vweird.f32 %v1649
        %vm1689 = vweird.f32 %v1683
        %vm1690 = vmor %vm1688, %vm1689
        %v1691 = vsel %vm1690, %v1683, %v1687
        %v1692 = vand.u32 2147483647, %v1649
        %vm1693 = vcmp.eq.f32.partialorder %v1692, 8.507059e+37
        %v1694 = vand.u32 %v1649, 2147483648
        %v1695 = vor.u32 1.1754944e-38, %v1694
        %v1696 = vsel %vm1693, %v1695, %v1691
        %v1697 = vmul.f32 %v1638, %v1696
        %v1698 = vrcp.pop %v1652
        %v1699 = vmul.f32 %v1652, %v1698
        %v1700 = vsub.f32 1.0, %v1699
        %v1701 = vmul.f32 %v1698, %v1700
        %v1702 = vadd.f32 %v1698, %v1701
        %vm1703 = vweird.f32 %v1652
        %vm1704 = vweird.f32 %v1698
        %vm1705 = vmor %vm1703, %vm1704
        %v1706 = vsel %vm1705, %v1698, %v1702
        %v1707 = vand.u32 2147483647, %v1652
        %vm1708 = vcmp.eq.f32.partialorder %v1707, 8.507059e+37
        %v1709 = vand.u32 %v1652, 2147483648
        %v1710 = vor.u32 1.1754944e-38, %v1709
        %v1711 = vsel %vm1708, %v1710, %v1706
        %v1712 = vmul.f32 %v1640, %v1711
        %v1714 = vsel %vm879, %v1667, 0
        %1716 = vmatpush.msra.mxu0 0.0
        %1717 = vmatpush.msra.mxu0 0.0
        %1718 = vmatpush.msra.mxu0 0.0
        %1719 = vmatpush.msra.mxu0 0.0
        %1720 = vmatpush.msra.mxu0 0.0
        %1721 = vmatpush.msra.mxu0 0.0
        %1722 = vmatpush.msra.mxu0 0.0
        %1723 = vmatpush.msra.mxu0 0.0
        %1724 = vmatpush.msra.mxu0 0.0
        %1725 = vmatpush.msra.mxu0 0.0
        %1726 = vmatpush.msra.mxu0 0.0
        %1727 = vmatpush.msra.mxu0 0.0
        %1728 = vmatpush.msra.mxu0 0.0
        %1729 = vmatpush.msra.mxu0 0.0
        %1730 = vmatpush.msra.mxu0 0.0
        %1731 = vmatpush.msra.mxu0 %v1497
        %1732 = vmatmul.f32.gmra.mxu0 %v1714
        %v1733 = vpop.f32.mrf.mxu0
        %v1734 = vadd.f32 0.0, %v1733
        %1735 = vdwg.mxu0
        %1737 = vrot.lane.b32.xlu0 %v1497, 120
        %v1738 = vpop.permute.xlu0 %1737
        %v1741 = vsel %vm879, %v1682, 0
        %1743 = vmatpush.msra.mxu0 0.0
        %1744 = vmatpush.msra.mxu0 0.0
        %1745 = vmatpush.msra.mxu0 0.0
        %1746 = vmatpush.msra.mxu0 0.0
        %1747 = vmatpush.msra.mxu0 0.0
        %1748 = vmatpush.msra.mxu0 0.0
        %1749 = vmatpush.msra.mxu0 0.0
        %1750 = vmatpush.msra.mxu0 0.0
        %1751 = vmatpush.msra.mxu0 0.0
        %1752 = vmatpush.msra.mxu0 0.0
        %1753 = vmatpush.msra.mxu0 0.0
        %1754 = vmatpush.msra.mxu0 0.0
        %1755 = vmatpush.msra.mxu0 0.0
        %1756 = vmatpush.msra.mxu0 0.0
        %1757 = vmatpush.msra.mxu0 0.0
        %1758 = vmatpush.msra.mxu0 %v1738
        %1759 = vmatmul.f32.gmra.mxu0 %v1741
        %v1760 = vpop.f32.mrf.mxu0
        %v1761 = vadd.f32 0.0, %v1760
        %1762 = vdwg.mxu0
        %1763 = vrot.lane.b32.xlu0 %v1497, 112
        %v1764 = vpop.permute.xlu0 %1763
        %v1767 = vsel %vm879, %v1697, 0
        %1769 = vmatpush.msra.mxu0 0.0
        %1770 = vmatpush.msra.mxu0 0.0
        %1771 = vmatpush.msra.mxu0 0.0
        %1772 = vmatpush.msra.mxu0 0.0
        %1773 = vmatpush.msra.mxu0 0.0
        %1774 = vmatpush.msra.mxu0 0.0
        %1775 = vmatpush.msra.mxu0 0.0
        %1776 = vmatpush.msra.mxu0 0.0
        %1777 = vmatpush.msra.mxu0 0.0
        %1778 = vmatpush.msra.mxu0 0.0
        %1779 = vmatpush.msra.mxu0 0.0
        %1780 = vmatpush.msra.mxu0 0.0
        %1781 = vmatpush.msra.mxu0 0.0
        %1782 = vmatpush.msra.mxu0 0.0
        %1783 = vmatpush.msra.mxu0 0.0
        %1784 = vmatpush.msra.mxu0 %v1764
        %1785 = vmatmul.f32.gmra.mxu0 %v1767
        %v1786 = vpop.f32.mrf.mxu0
        %v1787 = vadd.f32 0.0, %v1786
        %1788 = vdwg.mxu0
        %1789 = vrot.lane.b32.xlu0 %v1497, 104
        %v1790 = vpop.permute.xlu0 %1789
        %v1793 = vsel %vm879, %v1712, 0
        %1795 = vmatpush.msra.mxu0 0.0
        %1796 = vmatpush.msra.mxu0 0.0
        %1797 = vmatpush.msra.mxu0 0.0
        %1798 = vmatpush.msra.mxu0 0.0
        %1799 = vmatpush.msra.mxu0 0.0
        %1800 = vmatpush.msra.mxu0 0.0
        %1801 = vmatpush.msra.mxu0 0.0
        %1802 = vmatpush.msra.mxu0 0.0
        %1803 = vmatpush.msra.mxu0 0.0
        %1804 = vmatpush.msra.mxu0 0.0
        %1805 = vmatpush.msra.mxu0 0.0
        %1806 = vmatpush.msra.mxu0 0.0
        %1807 = vmatpush.msra.mxu0 0.0
        %1808 = vmatpush.msra.mxu0 0.0
        %1809 = vmatpush.msra.mxu0 0.0
        %1810 = vmatpush.msra.mxu0 %v1790
        %1811 = vmatmul.f32.gmra.mxu0 %v1793
        %v1812 = vpop.f32.mrf.mxu0
        %v1813 = vadd.f32 0.0, %v1812
        %1814 = vdwg.mxu0
        %1816 = vrot.lane.b32.xlu0 %v1761, 8
        %v1817 = vpop.permute.xlu0 %1816
        %1820 = vrot.lane.b32.xlu0 %v1787, 16
        %v1821 = vpop.permute.xlu0 %1820
        %1824 = vrot.lane.b32.xlu0 %v1813, 24
        %v1825 = vpop.permute.xlu0 %1824
        %v1827 = vsel %vm879, %v1734, %v1817
        %v1828 = vsel %vm1209, %v1827, %v1821
        %v1829 = vsel %vm1211, %v1828, %v1825
        %s1830 = scalar_lea.vmem %s8, 32
        %v1831 = vld [vmem:[%s1830] sm:$0xff]
        %v1832 = vld [vmem:[%s1830 + $0x8] sm:$0xff]
        %v1833 = vld [vmem:[%s1830 + $0x10] sm:$0xff]
        %v1834 = vld [vmem:[%s1830 + $0x18] sm:$0xff]
        %v1836 = vsel %vm750, %v1829, 0
        %1838 = vmatpush.msra.mxu0 0.0
        %1839 = vmatpush.msra.mxu0 0.0
        %1840 = vmatpush.msra.mxu0 0.0
        %1841 = vmatpush.msra.mxu0 0.0
        %1842 = vmatpush.msra.mxu0 0.0
        %1843 = vmatpush.msra.mxu0 0.0
        %1844 = vmatpush.msra.mxu0 0.0
        %1845 = vmatpush.msra.mxu0 0.0
        %1846 = vmatpush.msra.mxu0 0.0
        %1847 = vmatpush.msra.mxu0 0.0
        %1848 = vmatpush.msra.mxu0 0.0
        %1849 = vmatpush.msra.mxu0 0.0
        %1850 = vmatpush.msra.mxu0 %v1834
        %1851 = vmatpush.msra.mxu0 %v1833
        %1852 = vmatpush.msra.mxu0 %v1832
        %1853 = vmatpush.msra.mxu0 %v1831
        %1854 = vmatmul.f32.gmra.mxu0 %v1836
        %v1855 = vpop.f32.mrf.mxu0
        %v1856 = vadd.f32 0.0, %v1855
        %1857 = vdwg.mxu0
        %v1858 = vadd.f32 %v1371, %v1856
        %s1859 = scalar_lea.vmem [#allocation13], 1
        %v1860 = vld [vmem:[%s1859] sm:$0x1]
        %v1862 = vperm.slane %v1860, 0
        %v1864 = vadd.f32 %v1858, %v1862
        %s1865 = scalar_lea.vmem [#allocation14], 1
        %v1866 = vld [vmem:[%s1865] sm:$0x1]
        %s1867 = scalar_lea.vmem [#allocation16], 1
        %v1868 = vld [vmem:[%s1867] sm:$0x1]
        %v1869 = vsel %vm750, %v1864, 0.0
        %1870 = vadd.xlane.f32.xlu0 %v1869
        %v1871 = vpop.xlane.xlu0 %1870
        %v1872 = vmul.f32 %v1871, %v760
        %v1873 = vsub.f32 %v1864, %v1872
        %v1874 = vmul.f32 %v1873, %v1873
        %v1875 = vsel %vm750, %v1874, 0.0
        %1876 = vadd.xlane.f32.xlu0 %v1875
        %v1877 = vpop.xlane.xlu0 %1876
        %v1878 = vmul.f32 %v1877, %v760
        %v1879 = vadd.f32 %v1878, 1e-05
        %v1880 = vrsqrt.pop %v1879
        %v1881 = vmul.f32 %v1880, %v1879
        %v1882 = vmul.f32 %v1881, %v1880
        %v1883 = vmul.f32 0.5, %v1882
        %v1884 = vsub.f32 1.5, %v1883
        %v1885 = vmul.f32 %v1880, %v1884
        %vm1886 = vweird.f32 %v1879
        %vm1887 = vweird.f32 %v1880
        %vm1888 = vmor %vm1886, %vm1887
        %v1889 = vsel %vm1888, %v1880, %v1885
        %v1890 = vmul.f32 %v1873, %v1889
        %v1892 = vperm.slane %v1866, 0
        %v1894 = vmul.f32 %v1890, %v1892
        %v1896 = vperm.slane %v1868, 0
        %v1898 = vadd.f32 %v1894, %v1896
        %s1899 = scalar_lea.vmem %s12, 32
        %v1900 = vld [vmem:[%s1899] sm:$0xff]
        %v1901 = vld [vmem:[%s1899 + $0x8] sm:$0xff]
        %v1902 = vld [vmem:[%s1899 + $0x10] sm:$0xff]
        %v1903 = vld [vmem:[%s1899 + $0x18] sm:$0xff]
        %s1904 = scalar_lea.vmem [#allocation17], 1
        %v1905 = vld [vmem:[%s1904] sm:$0x1]
        %v1907 = vperm.slane %v1905, 0
        %v1910 = vsel %vm750, %v1898, 0
        %1912 = vmatpush.msra.mxu0 0.0
        %1913 = vmatpush.msra.mxu0 0.0
        %1914 = vmatpush.msra.mxu0 0.0
        %1915 = vmatpush.msra.mxu0 0.0
        %1916 = vmatpush.msra.mxu0 0.0
        %1917 = vmatpush.msra.mxu0 0.0
        %1918 = vmatpush.msra.mxu0 0.0
        %1919 = vmatpush.msra.mxu0 0.0
        %1920 = vmatpush.msra.mxu0 0.0
        %1921 = vmatpush.msra.mxu0 0.0
        %1922 = vmatpush.msra.mxu0 0.0
        %1923 = vmatpush.msra.mxu0 0.0
        %1924 = vmatpush.msra.mxu0 %v1903
        %1925 = vmatpush.msra.mxu0 %v1902
        %1926 = vmatpush.msra.mxu0 %v1901
        %1927 = vmatpush.msra.mxu0 %v1900
        %1928 = vmatmul.f32.gmra.mxu0 %v1910
        %v1929 = vpop.f32.mrf.mxu0
        %v1930 = vadd.f32 %v1907, %v1929
        %1931 = vdwg.mxu0
        %v1932 = vmul.f32 %v1930, 1.702
        %v1933 = vxor.u32 %v1932, 2147483648
        %v1934 = vmul.f32 %v1933, 1.442695
        %v1935 = vpow.pop %v1934
        %v1936 = vadd.f32 %v1935, 1.0
        %v1937 = vrcp.pop %v1936
        %v1938 = vmul.f32 %v1936, %v1937
        %v1939 = vsub.f32 1.0, %v1938
        %v1940 = vmul.f32 %v1937, %v1939
        %v1941 = vadd.f32 %v1937, %v1940
        %vm1942 = vweird.f32 %v1936
        %vm1943 = vweird.f32 %v1937
        %vm1944 = vmor %vm1942, %vm1943
        %v1945 = vsel %vm1944, %v1937, %v1941
        %v1946 = vand.u32 2147483647, %v1936
        %vm1947 = vcmp.eq.f32.partialorder %v1946, 8.507059e+37
        %v1948 = vand.u32 %v1936, 2147483648
        %v1949 = vor.u32 1.1754944e-38, %v1948
        %v1950 = vsel %vm1947, %v1949, %v1945
        %v1951 = vmul.f32 1.0, %v1950
        %v1952 = vmul.f32 %v1930, %v1951
        %s1953 = scalar_lea.vmem %s14, 128
        %v1954 = vld [vmem:[%s1953] sm:$0xff]
        %v1955 = vld [vmem:[%s1953 + $0x8] sm:$0xff]
        %v1956 = vld [vmem:[%s1953 + $0x10] sm:$0xff]
        %v1957 = vld [vmem:[%s1953 + $0x18] sm:$0xff]
        %v1958 = vld [vmem:[%s1953 + $0x20] sm:$0xff]
        %v1959 = vld [vmem:[%s1953 + $0x28] sm:$0xff]
        %v1960 = vld [vmem:[%s1953 + $0x30] sm:$0xff]
        %v1961 = vld [vmem:[%s1953 + $0x38] sm:$0xff]
        %v1962 = vld [vmem:[%s1953 + $0x40] sm:$0xff]
        %v1963 = vld [vmem:[%s1953 + $0x48] sm:$0xff]
        %v1964 = vld [vmem:[%s1953 + $0x50] sm:$0xff]
        %v1965 = vld [vmem:[%s1953 + $0x58] sm:$0xff]
        %v1966 = vld [vmem:[%s1953 + $0x60] sm:$0xff]
        %v1967 = vld [vmem:[%s1953 + $0x68] sm:$0xff]
        %v1968 = vld [vmem:[%s1953 + $0x70] sm:$0xff]
        %v1969 = vld [vmem:[%s1953 + $0x78] sm:$0xff]
        %1970 = vmatpush.msra.mxu0 %v1969
        %1971 = vmatpush.msra.mxu0 %v1968
        %1972 = vmatpush.msra.mxu0 %v1967
        %1973 = vmatpush.msra.mxu0 %v1966
        %1974 = vmatpush.msra.mxu0 %v1965
        %1975 = vmatpush.msra.mxu0 %v1964
        %1976 = vmatpush.msra.mxu0 %v1963
        %1977 = vmatpush.msra.mxu0 %v1962
        %1978 = vmatpush.msra.mxu0 %v1961
        %1979 = vmatpush.msra.mxu0 %v1960
        %1980 = vmatpush.msra.mxu0 %v1959
        %1981 = vmatpush.msra.mxu0 %v1958
        %1982 = vmatpush.msra.mxu0 %v1957
        %1983 = vmatpush.msra.mxu0 %v1956
        %1984 = vmatpush.msra.mxu0 %v1955
        %1985 = vmatpush.msra.mxu0 %v1954
        %1986 = vmatmul.f32.gmra.mxu0 %v1952
        %v1987 = vpop.f32.mrf.mxu0
        %v1988 = vadd.f32 0.0, %v1987
        %1989 = vdwg.mxu0
        %v1990 = vadd.f32 %v1864, %v1988
        %s1991 = scalar_lea.vmem [#allocation19], 1
        %v1992 = vld [vmem:[%s1991] sm:$0x1]
        %v1994 = vperm.slane %v1992, 0
        %v1996 = vadd.f32 %v1990, %v1994
        %1997 = vst.msk [vmem:[#allocation2] sm:$0xff] %vm750, %v1996
        %s1998 = sld [smem:[#allocation4 + %s49]]
        %s1999 = scalar_lea.vmem [#allocation2], %s1998
        %v2000 = vld [vmem:[%s1999] sm:$0x1]
        %v2001 = vld [vmem:[%s16] sm:$0x1]
        %v2002 = vld [vmem:[#allocation20] sm:$0x1]
        %vm2003 = vcmask 253952
        %v2004 = vsel %vm2003, %v2000, 0.0
        %2005 = vadd.xlane.f32.xlu0 %v2004
        %v2006 = vpop.xlane.xlu0 %2005
        %v2007 = vmul.f32 %v2006, %v760
        %v2008 = vsub.f32 %v2000, %v2007
        %v2009 = vmul.f32 %v2008, %v2008
        %v2010 = vsel %vm2003, %v2009, 0.0
        %2011 = vadd.xlane.f32.xlu0 %v2010
        %v2012 = vpop.xlane.xlu0 %2011
        %v2013 = vmul.f32 %v2012, %v760
        %v2014 = vadd.f32 %v2013, 1e-05
        %v2015 = vrsqrt.pop %v2014
        %v2016 = vmul.f32 %v2015, %v2014
        %v2017 = vmul.f32 %v2016, %v2015
        %v2018 = vmul.f32 0.5, %v2017
        %v2019 = vsub.f32 1.5, %v2018
        %v2020 = vmul.f32 %v2015, %v2019
        %vm2021 = vweird.f32 %v2014
        %vm2022 = vweird.f32 %v2015
        %vm2023 = vmor %vm2021, %vm2022
        %v2024 = vsel %vm2023, %v2015, %v2020
        %v2025 = vmul.f32 %v2008, %v2024
        %v2026 = vmul.f32 %v2025, %v2001
        %v2027 = vadd.f32 %v2026, %v2002
        %v2028 = vld [vmem:[%s18] sm:$0xff]
        %v2029 = vld [vmem:[%s18 + $0x8] sm:$0xff]
        %v2030 = vld [vmem:[%s18 + $0x10] sm:$0xff]
        %v2031 = vld [vmem:[%s18 + $0x18] sm:$0xff]
        %v2033 = vsel %vm750, %v2027, 0
        %2035 = vmatpush.msra.mxu0 0.0
        %2036 = vmatpush.msra.mxu0 0.0
        %2037 = vmatpush.msra.mxu0 0.0
        %2038 = vmatpush.msra.mxu0 0.0
        %2039 = vmatpush.msra.mxu0 0.0
        %2040 = vmatpush.msra.mxu0 0.0
        %2041 = vmatpush.msra.mxu0 0.0
        %2042 = vmatpush.msra.mxu0 0.0
        %2043 = vmatpush.msra.mxu0 0.0
        %2044 = vmatpush.msra.mxu0 0.0
        %2045 = vmatpush.msra.mxu0 0.0
        %2046 = vmatpush.msra.mxu0 0.0
        %2047 = vmatpush.msra.mxu0 %v2031
        %2048 = vmatpush.msra.mxu0 %v2030
        %2049 = vmatpush.msra.mxu0 %v2029
        %2050 = vmatpush.msra.mxu0 %v2028
        %2051 = vmatmul.f32.gmra.mxu0 %v2033
        %v2052 = vpop.f32.mrf.mxu0
        %v2053 = vadd.f32 0.0, %v2052
        %2054 = vdwg.mxu0
        %vm2055 = vcmask 122880
        %2056 = vst.msk [vmem:[%s743] sm:$0x1] %vm2055, %v2053
        %s2057 = sand.u32 %s440, 1
        %s2058 = scalar_lea.sflag [#allocation7], %s2057
        %s2059 = sand.u32 %s440, 1
        %s2060 = scalar_lea.vmem [#allocation22], %s2059
        // Predicated region
        $region133: #{text_encoder.1} parent=91 // pred_check
          %p2061 = pneg %p450
        $region134: #{text_encoder.1} parent=91 // pred_check_branch
          %2063 = sbr.rel (%p2061) target = $region136
        $region135: #{text_encoder.1} parent=91 // pred_region
          %2065 = vsyncadd %s2058, 0
          %s2066 = scalar_lea.hbm %s19, %s49
          %s2068 = sshll.u32 %s2060, 4
          %s2069 = int_to_ptr.vmem [resolvable:$true] %s2068
          %s2070 = sshll.u32 %s2066, 4
          %s2071 = int_to_ptr.hbm [resolvable:$true] %s2070
          %2073 = dma.vmem_to_hbm [thread:$0]  %s2069, 16, %s2071, %s2058
        $region136: #{text_encoder.1} parent=91 // pred_fallthru
          _
      $region92: #{text_encoder.1} parent=5 // pred_fallthru
        _
      %p2074 = scmp.le.s32.totalorder 2, %s44
      // Predicated region
      $region137: #{text_encoder.1} parent=5 // pred_check
        %p2075 = pneg %p2074
      $region138: #{text_encoder.1} parent=5 // pred_check_branch
        %2077 = sbr.rel (%p2075) target = $region140
      $region139: #{text_encoder.1} parent=5 // pred_region
        %s2078 = ssub.s32 %s44, 2
        // Predicated region
        $region141: #{text_encoder.1} parent=139 // pred_check
          %p2079 = pneg %p456
        $region142: #{text_encoder.1} parent=139 // pred_check_branch
          %2081 = sbr.rel (%p2079) target = $region144
        $region143: #{text_encoder.1} parent=139 // pred_region
          %s2082 = sand.u32 %s441, 1
          %s2083 = scalar_lea.sflag [#allocation7], %s2082
          %s2084 = sand.u32 %s441, 1
          %s2085 = scalar_lea.vmem [#allocation22], %s2084
          %2087 = dma.done %s2083, 16
        $region144: #{text_encoder.1} parent=139 // pred_fallthru
          _
      $region140: #{text_encoder.1} parent=5 // pred_fallthru
        _
    $region6: #{text_encoder.1} parent=1 // loop_footer
      %s48 = sadd.s32 1, %s44
    $region7: #{text_encoder.1} parent=1 // loop_footer_branch
      %43 = sbr.rel target = $region3
    $region8: #{text_encoder.1} parent=1 // loop_exit
      _
    %2088 = vsyncpa [#allocation6], 1
    %s2089 = scalar_lea.sflag [#allocation6], 1
    %2090 = vsyncpa %s2089, 1
    %2091 = vsyncpa [#allocation9], 1
    %2092 = vsyncpa [#allocation12], 1
    %2093 = vsyncpa [#allocation15], 1
    %2094 = vsyncpa [#allocation18], 1
    %2095 = vsyncpa [#allocation21], 1
    %2096 = vsyncpa [#allocation7], 1
    %s2097 = scalar_lea.sflag [#allocation7], 1
    %2098 = vsyncpa %s2097, 1

</llo_original>
